<compile_context>
chip_gen: v6e
topology: v6e:2x2x1
jax: 0.10.0
libtpu: 0.0.40
codegen_flags: <defaults>
</compile_context>

<pallas_src>
import functools

import jax
import jax.numpy as jnp
from jax import lax
from jax.experimental import pallas as pl
from jax.experimental.pallas import tpu as pltpu


def _round_up(x, m):
    return (x + m - 1) // m * m


def _mm(a, b):
    # a @ b with f32 accumulation on the MXU.
    return lax.dot_general(a, b, (((1,), (0,)), ((), ())),
                           preferred_element_type=jnp.float32)


def _mm_nt(a, b):
    # a @ b.T without materializing the transpose.
    return lax.dot_general(a, b, (((1,), (1,)), ((), ())),
                           preferred_element_type=jnp.float32)


def _mm_tn(a, b):
    # a.T @ b without materializing the transpose.
    return lax.dot_general(a, b, (((0,), (0,)), ((), ())),
                           preferred_element_type=jnp.float32)


def _vmem_capacity_bytes():
    """Physical VMEM per core; conservative 64 MiB (v7x) fallback."""
    try:
        info = pltpu.get_tpu_info()
        for name in ("vmem_capacity_bytes", "vmem_size_bytes", "vmem_bytes"):
            v = getattr(info, name, None)
            if v:
                return int(v)
    except Exception:
        pass
    return 64 << 20


# --------------------------------------------------------------------------- #
# Path A: fused single call, adjacency resident in VMEM (v5e / v6e sweet spot)
# --------------------------------------------------------------------------- #
def _ignn_fused_kernel(feat_ref, y0_ref, adj_ref, w1_ref,
                       y_ref, z_ref,
                       znew_ref, ymm_ref, zmm_ref,
                       *, neg_fai_inv, y_scale, num_layer, tm, n_blocks,
                       mm_dtype, unroll_blocks):
    # State (y, z) lives directly in the VMEM output refs across layers.
    y_ref[...] = y0_ref[...]
    z_ref[...] = feat_ref[...]

    for _ in range(num_layer):                     # small & static -> unrolled
        # Cast this layer's y/z to the MXU dtype ONCE; row blocks slice these.
        ymm_ref[...] = y_ref[...].astype(mm_dtype)
        zmm_ref[...] = z_ref[...].astype(mm_dtype)

        def z_block(b, carry):
            r0 = pl.multiple_of(b * tm, tm)
            y_blk = ymm_ref[pl.ds(r0, tm), :]
            # inv folded into adj_pre and into the ReLU scale (inv > 0):
            #   inv*(relu(-fai*x) + gama*mix) == relu(-fai*inv*x) + inv*gama*mix
            s = _mm_nt(y_blk, ymm_ref[...])                        # (tm, N) f32
            s = jnp.maximum(neg_fai_inv * s, 0.0) + adj_ref[pl.ds(r0, tm), :]
            znew_ref[pl.ds(r0, tm), :] = _mm(s.astype(mm_dtype), zmm_ref[...])
            return carry

        # Single fori_loop -> bounded live range for the (tm, N) score slab.
        lax.fori_loop(0, n_blocks, z_block, 0, unroll=unroll_blocks)

        # y-update, reassociated: z @ ((z.T @ y) @ w1) -> only (D, D) temps.
        g = _mm(_mm_tn(zmm_ref[...], ymm_ref[...]).astype(mm_dtype),
                w1_ref[...].astype(mm_dtype))                      # (D, D) f32
        t = _mm(zmm_ref[...], g.astype(mm_dtype))                  # (N, D) f32
        y_ref[...] = feat_ref[...] - jnp.maximum(y_scale * t, 0.0)  # eval dropout=id
        z_ref[...] = znew_ref[...]


# --------------------------------------------------------------------------- #
# Path B: one gridded call per layer, adjacency streamed from HBM (v7x / big N)
# --------------------------------------------------------------------------- #
def _ignn_layer_kernel(feat_ref, y_ref, z_ref, g_ref, adj_ref,
                       ynew_ref, znew_ref,
                       *, neg_fai_inv, y_scale, tm, mm_dtype):
    r0 = pl.multiple_of(pl.program_id(0) * tm, tm)
    # z-update for this row block (adj block auto-DMA'd / double-buffered).
    y_blk = y_ref[pl.ds(r0, tm), :]
    s = _mm_nt(y_blk, y_ref[...])                                  # (tm, N) f32
    s = jnp.maximum(neg_fai_inv * s, 0.0) + adj_ref[...]
    # TODO(synk): column-block s and accumulate znew for very large N so the
    #   live temp shrinks to (tm, tn) and overlaps the next adjacency DMA.
    znew_ref[...] = _mm(s.astype(mm_dtype), z_ref[...])
    # y-update for this row block; g = (z.T @ y) @ w1 is computed once in XLA.
    t = _mm(z_ref[pl.ds(r0, tm), :], g_ref[...])                   # (tm, D) f32
    ynew_ref[...] = feat_ref[...] - jnp.maximum(y_scale * t, 0.0)


def ignn_rdl_forward(feat, org_adj, knn_adj, y0, w1, w2_t, b2,
                     *, alpha, beta, lamda, gama, fai, num_layer,
                     mm_dtype=jnp.bfloat16, block_rows=None, stream_adj=None):
    """IGNNRDL forward pass (eval mode).  Returns (logits, p)."""
    N, D = feat.shape
    f32 = jnp.float32
    feat = feat.astype(f32)
    y0 = y0.astype(f32)
    w1 = w1.astype(f32)

    inv = 1.0 / (gama * (1.0 + alpha + beta))       # > 0 -> fold into relu scale
    neg_fai_inv = float(-fai * inv)
    y_scale = float(fai / lamda)

    mm_dt = jnp.dtype(mm_dtype)
    adj_dtype = jnp.bfloat16 if mm_dt == jnp.dtype(jnp.bfloat16) else f32
    # Fold inv into the static adjacency mix (saves a (tm, N) VPU pass / block).
    adj_pre = ((inv * gama) * (alpha * org_adj.astype(f32)
                               + beta * knn_adj.astype(f32))).astype(adj_dtype)

    mm_bytes = mm_dt.itemsize
    adj_bytes = jnp.dtype(adj_dtype).itemsize
    sub = 16 if mm_bytes == 2 else 8                # sublane packing granularity

    def tile(rows):
        tm = max(sub, min(int(rows), _round_up(N, sub)))
        tm = _round_up(tm, sub)
        n_pad = _round_up(N, tm)
        return tm, n_pad, n_pad // tm

    cap = _vmem_capacity_bytes()

    # ---- path selection: adjacency resident in VMEM vs streamed from HBM -----
    tm_r, n_pad_r, nb_r = tile(block_rows or 512)   # big tiles when resident
    est_res = (adj_bytes * n_pad_r * n_pad_r                 # adjacency
               + 4 * n_pad_r * D * 5                         # feat,y0,y,z,znew
               + 2 * mm_bytes * n_pad_r * D                  # ymm, zmm scratch
               + (4 + mm_bytes) * tm_r * n_pad_r             # score slab + cast
               + 8 * D * D)
    resident_fits = int(1.4 * est_res) + (4 << 20) <= int(0.85 * cap)
    use_stream = (not resident_fits) if stream_adj is None else bool(stream_adj)

    if use_stream:
        # Smaller row tiles when streaming (fits v7x's 64 MiB with 2x adj bufs).
        tm, n_pad, n_blocks = tile(block_rows or 256)
    else:
        tm, n_pad, n_blocks = tm_r, n_pad_r, nb_r

    pad_r = n_pad - N
    if pad_r:
        feat_p = jnp.pad(feat, ((0, pad_r), (0, 0)))
        y0_p = jnp.pad(y0, ((0, pad_r), (0, 0)))
        adj_p = jnp.pad(adj_pre, ((0, pad_r), (0, pad_r)))
    else:
        feat_p, y0_p, adj_p = feat, y0, adj_pre

    fl_layer = 4 * n_pad * n_pad * D + 4 * n_pad * D * D + 2 * D ** 3

    if not use_stream:
        # ---- Path A: fused single call, adjacency resident in VMEM -----------
        kernel = functools.partial(
            _ignn_fused_kernel, neg_fai_inv=neg_fai_inv, y_scale=y_scale,
            num_layer=int(num_layer), tm=tm, n_blocks=n_blocks,
            mm_dtype=mm_dtype, unroll_blocks=int(min(n_blocks, 2)))
        vmem_limit = int(min(max(int(1.4 * est_res) + (4 << 20), 32 << 20),
                             int(0.9 * cap)))
        vmem_spec = pl.BlockSpec(memory_space=pltpu.MemorySpace.VMEM)
        y_pad, z_pad = pl.pallas_call(
            kernel,
            out_shape=(jax.ShapeDtypeStruct((n_pad, D), f32),
                       jax.ShapeDtypeStruct((n_pad, D), f32)),
            in_specs=[vmem_spec] * 4,
            out_specs=(vmem_spec, vmem_spec),
            scratch_shapes=[pltpu.VMEM((n_pad, D), f32),        # z_new
                            pltpu.VMEM((n_pad, D), mm_dtype),   # y  (MXU dtype)
                            pltpu.VMEM((n_pad, D), mm_dtype)],  # z  (MXU dtype)
            compiler_params=pltpu.CompilerParams(vmem_limit_bytes=vmem_limit),
            cost_estimate=pl.CostEstimate(
                flops=int(num_layer) * int(fl_layer),
                transcendentals=0,
                bytes_accessed=int(adj_bytes * n_pad * n_pad
                                   + 4 * (4 * n_pad * D + D * D))),
        )(feat_p, y0_p, adj_p, w1)
    else:
        # ---- Path B: per-layer grid over row blocks, adjacency streamed ------
        #   dimension_semantics=("parallel",): shards the FLOP-dominant z-update
        #   across v7x's two TensorCores; harmless (sequential) on v5e / v6e.
        est_strm = (2 * adj_bytes * tm * n_pad
                    + 4 * mm_bytes * n_pad * D
                    + (4 + mm_bytes) * tm * n_pad
                    + 4 * 6 * tm * D + 8 * D * D)
        vmem_limit = int(min(max(int(1.5 * est_strm) + (4 << 20), 32 << 20),
                             int(0.9 * cap)))
        kernel = functools.partial(
            _ignn_layer_kernel, neg_fai_inv=neg_fai_inv, y_scale=y_scale,
            tm=tm, mm_dtype=mm_dtype)
        layer_call = jax.jit(pl.pallas_call(
            kernel,
            out_shape=(jax.ShapeDtypeStruct((n_pad, D), f32),
                       jax.ShapeDtypeStruct((n_pad, D), f32)),
            grid=(n_blocks,),
            in_specs=[
                pl.BlockSpec((tm, D), lambda i: (i, 0)),        # feat block
                pl.BlockSpec((n_pad, D), lambda i: (0, 0)),     # y (full, mm dt)
                pl.BlockSpec((n_pad, D), lambda i: (0, 0)),     # z (full, mm dt)
                pl.BlockSpec((D, D), lambda i: (0, 0)),         # g
                pl.BlockSpec((tm, n_pad), lambda i: (i, 0)),    # adj (streamed)
            ],
            out_specs=(pl.BlockSpec((tm, D), lambda i: (i, 0)),
                       pl.BlockSpec((tm, D), lambda i: (i, 0))),
            compiler_params=pltpu.CompilerParams(
                dimension_semantics=("parallel",),
                vmem_limit_bytes=vmem_limit),
            cost_estimate=pl.CostEstimate(
                flops=int(4 * n_pad * n_pad * D + 2 * n_pad * D * D),
                transcendentals=0,
                bytes_accessed=int(adj_bytes * n_pad * n_pad
                                   + (3 * 4 + 2 * mm_bytes) * n_pad * D)),
        ))
        y_pad, z_pad = y0_p, feat_p
        for _ in range(num_layer):
            # Tiny (D, D) GEMM chain once per layer in XLA, full f32.
            with jax.default_matmul_precision("highest"):
                g = _mm(_mm_tn(z_pad, y_pad), w1)
            # TODO(synk): for very deep num_layer keep the s@z operand in f32
            #   (or pltpu.stochastic_round) to limit bf16 error compounding.
            y_pad, z_pad = layer_call(
                feat_p, y_pad.astype(mm_dtype), z_pad.astype(mm_dtype),
                g.astype(mm_dtype), adj_p)

    # ---- epilogue in XLA: l2-normalize rows, concat, tiny Linear(2D -> C) ----
    def _l2n(x):
        nrm = jnp.sqrt(jnp.sum(x * x, axis=1, keepdims=True))
        return x / jnp.maximum(nrm, 1e-12)           # F.normalize eps semantics

    p = jnp.concatenate([_l2n(y_pad[:N]), _l2n(z_pad[:N])], axis=1)
    with jax.default_matmul_precision("highest"):
        logits = p @ w2_t.astype(f32) + b2.astype(f32)
    return logits, p


def reference_forward(feat, org_adj, knn_adj, y0, w1, w2_t, b2,
                      *, alpha, beta, lamda, gama, fai, num_layer):
    with jax.default_matmul_precision("highest"):
        y, z = y0, feat
        for _ in range(num_layer):
            t = (z @ z.T) @ y @ w1
            y_n = feat - jnp.maximum((fai / lamda) * t, 0.0)
            s = jnp.maximum(-fai * (y @ y.T), 0.0)
            s = s + gama * (alpha * org_adj + beta * knn_adj)
            s = (1.0 / (gama * (1.0 + alpha + beta))) * s
            z = s @ z
            y = y_n

        def l2n(x):
            return x / jnp.maximum(jnp.linalg.norm(x, axis=1, keepdims=True),
                                   1e-12)

        p = jnp.concatenate([l2n(y), l2n(z)], axis=1)
        return p @ w2_t + b2, p


if __name__ == "__main__":
    # Hyperparameters (match the PyTorch module's __init__ signature).
    alpha, beta, lamda, gama, fai = 0.5, 0.3, 1.0, 0.8, 0.2
    num_class, dim, num_layer = 4, 32, 3
    N = 16  # number of graph nodes

    key = jax.random.PRNGKey(0)
    k_feat, k_y0, k_org, k_knn, k_w1, k_w2, k_b2 = jax.random.split(key, 7)

    feat = 0.1 * jax.random.normal(k_feat, (N, dim), jnp.float32)
    org_adj = jax.random.uniform(k_org, (N, N), jnp.float32)
    knn_adj = jax.random.uniform(k_knn, (N, N), jnp.float32)
    # y = torch.rand_like(feat): uniform [0, 1), supplied deterministically.
    y0 = jax.random.uniform(k_y0, (N, dim), jnp.float32)

    bound_w1 = (6.0 / (dim + dim)) ** 0.5
    w1 = jax.random.uniform(k_w1, (dim, dim), jnp.float32, -bound_w1, bound_w1)
    bound_w2 = (6.0 / (2 * dim + num_class)) ** 0.5
    w2 = jax.random.uniform(k_w2, (num_class, 2 * dim), jnp.float32,
                            -bound_w2, bound_w2)     # torch Linear weight (C, 2D)
    w2_t = w2.T                                       # wrapper consumes (2D, C)
    bound_b = 1.0 / (2 * dim) ** 0.5
    b2 = jax.random.uniform(k_b2, (1, num_class), jnp.float32, -bound_b, bound_b)

    hp = dict(alpha=alpha, beta=beta, lamda=lamda, gama=gama, fai=fai,
              num_layer=num_layer)

    ref_logits, ref_p = reference_forward(feat, org_adj, knn_adj, y0, w1, w2_t,
                                          b2, **hp)

    # --- Test 1: f32 MXU path, adj resident, 2-block fori (tm=8) --------------
    logits, p = ignn_rdl_forward(feat, org_adj, knn_adj, y0, w1, w2_t, b2, **hp,
                                 mm_dtype=jnp.float32, block_rows=8,
                                 stream_adj=False)
    jax.block_until_ready((logits, p))
    assert logits.shape == (N, num_class) and p.shape == (N, 2 * dim)
    assert jnp.allclose(p, ref_p, rtol=2e-2, atol=2e-3), "p mismatch (f32 res)"
    assert jnp.allclose(logits, ref_logits, rtol=2e-2, atol=2e-3), \
        "logits mismatch (f32 res)"

    # --- Test 2: f32, streamed/gridded path + padding (N=13 -> 2 row blocks) --
    N2 = 13
    ref_logits2, ref_p2 = reference_forward(
        feat[:N2], org_adj[:N2, :N2], knn_adj[:N2, :N2], y0[:N2],
        w1, w2_t, b2, **hp)
    logits2, p2 = ignn_rdl_forward(
        feat[:N2], org_adj[:N2, :N2], knn_adj[:N2, :N2], y0[:N2],
        w1, w2_t, b2, **hp, mm_dtype=jnp.float32, block_rows=8, stream_adj=True)
    jax.block_until_ready((logits2, p2))
    assert logits2.shape == (N2, num_class) and p2.shape == (N2, 2 * dim)
    assert jnp.allclose(p2, ref_p2, rtol=2e-2, atol=2e-3), "p mismatch (f32 grid)"
    assert jnp.allclose(logits2, ref_logits2, rtol=2e-2, atol=2e-3), \
        "logits mismatch (f32 grid)"

    # --- Test 3: default bf16 operands, adjacency resident --------------------
    logits_bf, p_bf = ignn_rdl_forward(feat, org_adj, knn_adj, y0, w1, w2_t, b2,
                                       **hp, stream_adj=False)
    jax.block_until_ready((logits_bf, p_bf))
    assert bool(jnp.all(jnp.isfinite(p_bf)))
    assert jnp.allclose(p_bf, ref_p, rtol=1e-1, atol=2e-2), "p mismatch (bf16)"
    assert jnp.allclose(logits_bf, ref_logits, rtol=1e-1, atol=2e-2), \
        "logits mismatch (bf16)"

    # --- Test 4: default bf16, streamed/gridded path ---------------------------
    logits_bs, p_bs = ignn_rdl_forward(feat, org_adj, knn_adj, y0, w1, w2_t, b2,
                                       **hp, stream_adj=True)
    jax.block_until_ready((logits_bs, p_bs))
    assert jnp.allclose(p_bs, ref_p, rtol=1e-1, atol=2e-2), "p mismatch (bf16 grid)"
    assert jnp.allclose(logits_bs, ref_logits, rtol=1e-1, atol=2e-2), \
        "logits mismatch (bf16 grid)"

    print("KERNEL_OK")
</pallas_src>

<mosaic_0001>
module attributes {stable_mosaic.version = 11 : i64} {
  func.func @_ignn_fused_kernel(%arg0: memref<16x32xf32, #tpu.memory_space<vmem>>, %arg1: memref<16x32xf32, #tpu.memory_space<vmem>>, %arg2: memref<16x16xf32, #tpu.memory_space<vmem>>, %arg3: memref<32x32xf32, #tpu.memory_space<vmem>>, %arg4: memref<16x32xf32, #tpu.memory_space<vmem>>, %arg5: memref<16x32xf32, #tpu.memory_space<vmem>>, %arg6: memref<16x32xf32, #tpu.memory_space<vmem>>, %arg7: memref<16x32xf32, #tpu.memory_space<vmem>>, %arg8: memref<16x32xf32, #tpu.memory_space<vmem>>) attributes {dimension_semantics = [], scalar_prefetch = 0 : i64, scratch_operands = 3 : i64, tpu.core_type = #tpu.core_type<tc>} {
    %c0 = arith.constant 0 : index
    %c0_0 = arith.constant 0 : index
    %0 = vector.load %arg1[%c0, %c0_0] : memref<16x32xf32, #tpu.memory_space<vmem>>, vector<16x32xf32>
    %c0_1 = arith.constant 0 : index
    %c0_2 = arith.constant 0 : index
    %1 = vector.load %arg4[%c0_1, %c0_2] : memref<16x32xf32, #tpu.memory_space<vmem>>, vector<16x32xf32>
    tpu.vector_store %arg4[%c0_1, %c0_2], %0 {strides = array<i32>} : memref<16x32xf32, #tpu.memory_space<vmem>>, vector<16x32xf32>,
    %c0_3 = arith.constant 0 : index
    %c0_4 = arith.constant 0 : index
    %2 = vector.load %arg0[%c0_3, %c0_4] : memref<16x32xf32, #tpu.memory_space<vmem>>, vector<16x32xf32>
    %c0_5 = arith.constant 0 : index
    %c0_6 = arith.constant 0 : index
    %3 = vector.load %arg5[%c0_5, %c0_6] : memref<16x32xf32, #tpu.memory_space<vmem>>, vector<16x32xf32>
    tpu.vector_store %arg5[%c0_5, %c0_6], %2 {strides = array<i32>} : memref<16x32xf32, #tpu.memory_space<vmem>>, vector<16x32xf32>,
    %c0_7 = arith.constant 0 : index
    %c0_8 = arith.constant 0 : index
    %4 = vector.load %arg4[%c0_7, %c0_8] : memref<16x32xf32, #tpu.memory_space<vmem>>, vector<16x32xf32>
    %c0_9 = arith.constant 0 : index
    %c0_10 = arith.constant 0 : index
    %5 = vector.load %arg7[%c0_9, %c0_10] : memref<16x32xf32, #tpu.memory_space<vmem>>, vector<16x32xf32>
    tpu.vector_store %arg7[%c0_9, %c0_10], %4 {strides = array<i32>} : memref<16x32xf32, #tpu.memory_space<vmem>>, vector<16x32xf32>,
    %c0_11 = arith.constant 0 : index
    %c0_12 = arith.constant 0 : index
    %6 = vector.load %arg5[%c0_11, %c0_12] : memref<16x32xf32, #tpu.memory_space<vmem>>, vector<16x32xf32>
    %c0_13 = arith.constant 0 : index
    %c0_14 = arith.constant 0 : index
    %7 = vector.load %arg8[%c0_13, %c0_14] : memref<16x32xf32, #tpu.memory_space<vmem>>, vector<16x32xf32>
    tpu.vector_store %arg8[%c0_13, %c0_14], %6 {strides = array<i32>} : memref<16x32xf32, #tpu.memory_space<vmem>>, vector<16x32xf32>,
    %c0_i32 = arith.constant 0 : i32
    %c8_i32 = arith.constant 8 : i32
    %8 = arith.muli %c0_i32, %c8_i32 : i32
    %9 = tpu.assume_multiple %8, 8 : i32
    %10 = arith.index_cast %9 : i32 to index
    %c0_15 = arith.constant 0 : index
    %11 = vector.load %arg7[%10, %c0_15] : memref<16x32xf32, #tpu.memory_space<vmem>>, vector<8x32xf32>
    %c0_16 = arith.constant 0 : index
    %c0_17 = arith.constant 0 : index
    %12 = vector.load %arg7[%c0_16, %c0_17] : memref<16x32xf32, #tpu.memory_space<vmem>>, vector<16x32xf32>
    %cst = arith.constant dense<0.000000e+00> : vector<8x16xf32>
    %13 = tpu.matmul %11, %12, %cst {dimension_numbers = #tpu.dot_dimension_numbers<[1], [1], [0], [0], [0, 0, 1, 0], [], []>} : vector<8x32xf32>, vector<16x32xf32>, vector<8x16xf32> -> vector<8x16xf32>
    %cst_18 = arith.constant -0.138888896 : f32
    %14 = vector.broadcast %cst_18 : f32 to vector<8x16xf32>
    %15 = arith.mulf %14, %13 : vector<8x16xf32>
    %cst_19 = arith.constant 0.000000e+00 : f32
    %16 = vector.broadcast %cst_19 : f32 to vector<8x16xf32>
    %17 = arith.maximumf %15, %16 : vector<8x16xf32>
    %18 = arith.index_cast %9 : i32 to index
    %c0_20 = arith.constant 0 : index
    %19 = vector.load %arg2[%18, %c0_20] : memref<16x16xf32, #tpu.memory_space<vmem>>, vector<8x16xf32>
    %20 = arith.addf %17, %19 : vector<8x16xf32>
    %c0_21 = arith.constant 0 : index
    %c0_22 = arith.constant 0 : index
    %21 = vector.load %arg8[%c0_21, %c0_22] : memref<16x32xf32, #tpu.memory_space<vmem>>, vector<16x32xf32>
    %cst_23 = arith.constant dense<0.000000e+00> : vector<8x32xf32>
    %22 = tpu.matmul %20, %21, %cst_23 {dimension_numbers = #tpu.dot_dimension_numbers<[1], [0], [0], [1], [0, 0, 1, 1], [], []>} : vector<8x16xf32>, vector<16x32xf32>, vector<8x32xf32> -> vector<8x32xf32>
    %23 = arith.index_cast %9 : i32 to index
    %c0_24 = arith.constant 0 : index
    %24 = vector.load %arg6[%23, %c0_24] : memref<16x32xf32, #tpu.memory_space<vmem>>, vector<8x32xf32>
    tpu.vector_store %arg6[%23, %c0_24], %22 {strides = array<i32>} : memref<16x32xf32, #tpu.memory_space<vmem>>, vector<8x32xf32>,
    %c1_i32 = arith.constant 1 : i32
    %c8_i32_25 = arith.constant 8 : i32
    %25 = arith.muli %c1_i32, %c8_i32_25 : i32
    %26 = tpu.assume_multiple %25, 8 : i32
    %27 = arith.index_cast %26 : i32 to index
    %c0_26 = arith.constant 0 : index
    %28 = vector.load %arg7[%27, %c0_26] : memref<16x32xf32, #tpu.memory_space<vmem>>, vector<8x32xf32>
    %c0_27 = arith.constant 0 : index
    %c0_28 = arith.constant 0 : index
    %29 = vector.load %arg7[%c0_27, %c0_28] : memref<16x32xf32, #tpu.memory_space<vmem>>, vector<16x32xf32>
    %cst_29 = arith.constant dense<0.000000e+00> : vector<8x16xf32>
    %30 = tpu.matmul %28, %29, %cst_29 {dimension_numbers = #tpu.dot_dimension_numbers<[1], [1], [0], [0], [0, 0, 1, 0], [], []>} : vector<8x32xf32>, vector<16x32xf32>, vector<8x16xf32> -> vector<8x16xf32>
    %cst_30 = arith.constant -0.138888896 : f32
    %31 = vector.broadcast %cst_30 : f32 to vector<8x16xf32>
    %32 = arith.mulf %31, %30 : vector<8x16xf32>
    %cst_31 = arith.constant 0.000000e+00 : f32
    %33 = vector.broadcast %cst_31 : f32 to vector<8x16xf32>
    %34 = arith.maximumf %32, %33 : vector<8x16xf32>
    %35 = arith.index_cast %26 : i32 to index
    %c0_32 = arith.constant 0 : index
    %36 = vector.load %arg2[%35, %c0_32] : memref<16x16xf32, #tpu.memory_space<vmem>>, vector<8x16xf32>
    %37 = arith.addf %34, %36 : vector<8x16xf32>
    %c0_33 = arith.constant 0 : index
    %c0_34 = arith.constant 0 : index
    %38 = vector.load %arg8[%c0_33, %c0_34] : memref<16x32xf32, #tpu.memory_space<vmem>>, vector<16x32xf32>
    %cst_35 = arith.constant dense<0.000000e+00> : vector<8x32xf32>
    %39 = tpu.matmul %37, %38, %cst_35 {dimension_numbers = #tpu.dot_dimension_numbers<[1], [0], [0], [1], [0, 0, 1, 1], [], []>} : vector<8x16xf32>, vector<16x32xf32>, vector<8x32xf32> -> vector<8x32xf32>
    %40 = arith.index_cast %26 : i32 to index
    %c0_36 = arith.constant 0 : index
    %41 = vector.load %arg6[%40, %c0_36] : memref<16x32xf32, #tpu.memory_space<vmem>>, vector<8x32xf32>
    tpu.vector_store %arg6[%40, %c0_36], %39 {strides = array<i32>} : memref<16x32xf32, #tpu.memory_space<vmem>>, vector<8x32xf32>,
    %c2_i32 = arith.constant 2 : i32
    %c0_37 = arith.constant 0 : index
    %c0_38 = arith.constant 0 : index
    %42 = vector.load %arg8[%c0_37, %c0_38] : memref<16x32xf32, #tpu.memory_space<vmem>>, vector<16x32xf32>
    %c0_39 = arith.constant 0 : index
    %c0_40 = arith.constant 0 : index
    %43 = vector.load %arg7[%c0_39, %c0_40] : memref<16x32xf32, #tpu.memory_space<vmem>>, vector<16x32xf32>
    %cst_41 = arith.constant dense<0.000000e+00> : vector<32x32xf32>
    %44 = tpu.matmul %42, %43, %cst_41 {dimension_numbers = #tpu.dot_dimension_numbers<[0], [0], [1], [1], [0, 1, 1, 1], [], []>} : vector<16x32xf32>, vector<16x32xf32>, vector<32x32xf32> -> vector<32x32xf32>
    %c0_42 = arith.constant 0 : index
    %c0_43 = arith.constant 0 : index
    %45 = vector.load %arg3[%c0_42, %c0_43] : memref<32x32xf32, #tpu.memory_space<vmem>>, vector<32x32xf32>
    %cst_44 = arith.constant dense<0.000000e+00> : vector<32x32xf32>
    %46 = tpu.matmul %44, %45, %cst_44 {dimension_numbers = #tpu.dot_dimension_numbers<[1], [0], [0], [1], [0, 0, 1, 1], [], []>} : vector<32x32xf32>, vector<32x32xf32>, vector<32x32xf32> -> vector<32x32xf32>
    %c0_45 = arith.constant 0 : index
    %c0_46 = arith.constant 0 : index
    %47 = vector.load %arg8[%c0_45, %c0_46] : memref<16x32xf32, #tpu.memory_space<vmem>>, vector<16x32xf32>
    %cst_47 = arith.constant dense<0.000000e+00> : vector<16x32xf32>
    %48 = tpu.matmul %47, %46, %cst_47 {dimension_numbers = #tpu.dot_dimension_numbers<[1], [0], [0], [1], [0, 0, 1, 1], [], []>} : vector<16x32xf32>, vector<32x32xf32>, vector<16x32xf32> -> vector<16x32xf32>
    %c0_48 = arith.constant 0 : index
    %c0_49 = arith.constant 0 : index
    %49 = vector.load %arg0[%c0_48, %c0_49] : memref<16x32xf32, #tpu.memory_space<vmem>>, vector<16x32xf32>
    %cst_50 = arith.constant 2.000000e-01 : f32
    %50 = vector.broadcast %cst_50 : f32 to vector<16x32xf32>
    %51 = arith.mulf %50, %48 : vector<16x32xf32>
    %cst_51 = arith.constant 0.000000e+00 : f32
    %52 = vector.broadcast %cst_51 : f32 to vector<16x32xf32>
    %53 = arith.maximumf %51, %52 : vector<16x32xf32>
    %54 = arith.subf %49, %53 : vector<16x32xf32>
    %c0_52 = arith.constant 0 : index
    %c0_53 = arith.constant 0 : index
    %55 = vector.load %arg4[%c0_52, %c0_53] : memref<16x32xf32, #tpu.memory_space<vmem>>, vector<16x32xf32>
    tpu.vector_store %arg4[%c0_52, %c0_53], %54 {strides = array<i32>} : memref<16x32xf32, #tpu.memory_space<vmem>>, vector<16x32xf32>,
    %c0_54 = arith.constant 0 : index
    %c0_55 = arith.constant 0 : index
    %56 = vector.load %arg6[%c0_54, %c0_55] : memref<16x32xf32, #tpu.memory_space<vmem>>, vector<16x32xf32>
    %c0_56 = arith.constant 0 : index
    %c0_57 = arith.constant 0 : index
    %57 = vector.load %arg5[%c0_56, %c0_57] : memref<16x32xf32, #tpu.memory_space<vmem>>, vector<16x32xf32>
    tpu.vector_store %arg5[%c0_56, %c0_57], %56 {strides = array<i32>} : memref<16x32xf32, #tpu.memory_space<vmem>>, vector<16x32xf32>,
    %c0_58 = arith.constant 0 : index
    %c0_59 = arith.constant 0 : index
    %58 = vector.load %arg4[%c0_58, %c0_59] : memref<16x32xf32, #tpu.memory_space<vmem>>, vector<16x32xf32>
    %c0_60 = arith.constant 0 : index
    %c0_61 = arith.constant 0 : index
    %59 = vector.load %arg7[%c0_60, %c0_61] : memref<16x32xf32, #tpu.memory_space<vmem>>, vector<16x32xf32>
    tpu.vector_store %arg7[%c0_60, %c0_61], %58 {strides = array<i32>} : memref<16x32xf32, #tpu.memory_space<vmem>>, vector<16x32xf32>,
    %c0_62 = arith.constant 0 : index
    %c0_63 = arith.constant 0 : index
    %60 = vector.load %arg5[%c0_62, %c0_63] : memref<16x32xf32, #tpu.memory_space<vmem>>, vector<16x32xf32>
    %c0_64 = arith.constant 0 : index
    %c0_65 = arith.constant 0 : index
    %61 = vector.load %arg8[%c0_64, %c0_65] : memref<16x32xf32, #tpu.memory_space<vmem>>, vector<16x32xf32>
    tpu.vector_store %arg8[%c0_64, %c0_65], %60 {strides = array<i32>} : memref<16x32xf32, #tpu.memory_space<vmem>>, vector<16x32xf32>,
    %c0_i32_66 = arith.constant 0 : i32
    %c8_i32_67 = arith.constant 8 : i32
    %62 = arith.muli %c0_i32_66, %c8_i32_67 : i32
    %63 = tpu.assume_multiple %62, 8 : i32
    %64 = arith.index_cast %63 : i32 to index
    %c0_68 = arith.constant 0 : index
    %65 = vector.load %arg7[%64, %c0_68] : memref<16x32xf32, #tpu.memory_space<vmem>>, vector<8x32xf32>
    %c0_69 = arith.constant 0 : index
    %c0_70 = arith.constant 0 : index
    %66 = vector.load %arg7[%c0_69, %c0_70] : memref<16x32xf32, #tpu.memory_space<vmem>>, vector<16x32xf32>
    %cst_71 = arith.constant dense<0.000000e+00> : vector<8x16xf32>
    %67 = tpu.matmul %65, %66, %cst_71 {dimension_numbers = #tpu.dot_dimension_numbers<[1], [1], [0], [0], [0, 0, 1, 0], [], []>} : vector<8x32xf32>, vector<16x32xf32>, vector<8x16xf32> -> vector<8x16xf32>
    %cst_72 = arith.constant -0.138888896 : f32
    %68 = vector.broadcast %cst_72 : f32 to vector<8x16xf32>
    %69 = arith.mulf %68, %67 : vector<8x16xf32>
    %cst_73 = arith.constant 0.000000e+00 : f32
    %70 = vector.broadcast %cst_73 : f32 to vector<8x16xf32>
    %71 = arith.maximumf %69, %70 : vector<8x16xf32>
    %72 = arith.index_cast %63 : i32 to index
    %c0_74 = arith.constant 0 : index
    %73 = vector.load %arg2[%72, %c0_74] : memref<16x16xf32, #tpu.memory_space<vmem>>, vector<8x16xf32>
    %74 = arith.addf %71, %73 : vector<8x16xf32>
    %c0_75 = arith.constant 0 : index
    %c0_76 = arith.constant 0 : index
    %75 = vector.load %arg8[%c0_75, %c0_76] : memref<16x32xf32, #tpu.memory_space<vmem>>, vector<16x32xf32>
    %cst_77 = arith.constant dense<0.000000e+00> : vector<8x32xf32>
    %76 = tpu.matmul %74, %75, %cst_77 {dimension_numbers = #tpu.dot_dimension_numbers<[1], [0], [0], [1], [0, 0, 1, 1], [], []>} : vector<8x16xf32>, vector<16x32xf32>, vector<8x32xf32> -> vector<8x32xf32>
    %77 = arith.index_cast %63 : i32 to index
    %c0_78 = arith.constant 0 : index
    %78 = vector.load %arg6[%77, %c0_78] : memref<16x32xf32, #tpu.memory_space<vmem>>, vector<8x32xf32>
    tpu.vector_store %arg6[%77, %c0_78], %76 {strides = array<i32>} : memref<16x32xf32, #tpu.memory_space<vmem>>, vector<8x32xf32>,
    %c1_i32_79 = arith.constant 1 : i32
    %c8_i32_80 = arith.constant 8 : i32
    %79 = arith.muli %c1_i32_79, %c8_i32_80 : i32
    %80 = tpu.assume_multiple %79, 8 : i32
    %81 = arith.index_cast %80 : i32 to index
    %c0_81 = arith.constant 0 : index
    %82 = vector.load %arg7[%81, %c0_81] : memref<16x32xf32, #tpu.memory_space<vmem>>, vector<8x32xf32>
    %c0_82 = arith.constant 0 : index
    %c0_83 = arith.constant 0 : index
    %83 = vector.load %arg7[%c0_82, %c0_83] : memref<16x32xf32, #tpu.memory_space<vmem>>, vector<16x32xf32>
    %cst_84 = arith.constant dense<0.000000e+00> : vector<8x16xf32>
    %84 = tpu.matmul %82, %83, %cst_84 {dimension_numbers = #tpu.dot_dimension_numbers<[1], [1], [0], [0], [0, 0, 1, 0], [], []>} : vector<8x32xf32>, vector<16x32xf32>, vector<8x16xf32> -> vector<8x16xf32>
    %cst_85 = arith.constant -0.138888896 : f32
    %85 = vector.broadcast %cst_85 : f32 to vector<8x16xf32>
    %86 = arith.mulf %85, %84 : vector<8x16xf32>
    %cst_86 = arith.constant 0.000000e+00 : f32
    %87 = vector.broadcast %cst_86 : f32 to vector<8x16xf32>
    %88 = arith.maximumf %86, %87 : vector<8x16xf32>
    %89 = arith.index_cast %80 : i32 to index
    %c0_87 = arith.constant 0 : index
    %90 = vector.load %arg2[%89, %c0_87] : memref<16x16xf32, #tpu.memory_space<vmem>>, vector<8x16xf32>
    %91 = arith.addf %88, %90 : vector<8x16xf32>
    %c0_88 = arith.constant 0 : index
    %c0_89 = arith.constant 0 : index
    %92 = vector.load %arg8[%c0_88, %c0_89] : memref<16x32xf32, #tpu.memory_space<vmem>>, vector<16x32xf32>
    %cst_90 = arith.constant dense<0.000000e+00> : vector<8x32xf32>
    %93 = tpu.matmul %91, %92, %cst_90 {dimension_numbers = #tpu.dot_dimension_numbers<[1], [0], [0], [1], [0, 0, 1, 1], [], []>} : vector<8x16xf32>, vector<16x32xf32>, vector<8x32xf32> -> vector<8x32xf32>
    %94 = arith.index_cast %80 : i32 to index
    %c0_91 = arith.constant 0 : index
    %95 = vector.load %arg6[%94, %c0_91] : memref<16x32xf32, #tpu.memory_space<vmem>>, vector<8x32xf32>
    tpu.vector_store %arg6[%94, %c0_91], %93 {strides = array<i32>} : memref<16x32xf32, #tpu.memory_space<vmem>>, vector<8x32xf32>,
    %c2_i32_92 = arith.constant 2 : i32
    %c0_93 = arith.constant 0 : index
    %c0_94 = arith.constant 0 : index
    %96 = vector.load %arg8[%c0_93, %c0_94] : memref<16x32xf32, #tpu.memory_space<vmem>>, vector<16x32xf32>
    %c0_95 = arith.constant 0 : index
    %c0_96 = arith.constant 0 : index
    %97 = vector.load %arg7[%c0_95, %c0_96] : memref<16x32xf32, #tpu.memory_space<vmem>>, vector<16x32xf32>
    %cst_97 = arith.constant dense<0.000000e+00> : vector<32x32xf32>
    %98 = tpu.matmul %96, %97, %cst_97 {dimension_numbers = #tpu.dot_dimension_numbers<[0], [0], [1], [1], [0, 1, 1, 1], [], []>} : vector<16x32xf32>, vector<16x32xf32>, vector<32x32xf32> -> vector<32x32xf32>
    %c0_98 = arith.constant 0 : index
    %c0_99 = arith.constant 0 : index
    %99 = vector.load %arg3[%c0_98, %c0_99] : memref<32x32xf32, #tpu.memory_space<vmem>>, vector<32x32xf32>
    %cst_100 = arith.constant dense<0.000000e+00> : vector<32x32xf32>
    %100 = tpu.matmul %98, %99, %cst_100 {dimension_numbers = #tpu.dot_dimension_numbers<[1], [0], [0], [1], [0, 0, 1, 1], [], []>} : vector<32x32xf32>, vector<32x32xf32>, vector<32x32xf32> -> vector<32x32xf32>
    %c0_101 = arith.constant 0 : index
    %c0_102 = arith.constant 0 : index
    %101 = vector.load %arg8[%c0_101, %c0_102] : memref<16x32xf32, #tpu.memory_space<vmem>>, vector<16x32xf32>
    %cst_103 = arith.constant dense<0.000000e+00> : vector<16x32xf32>
    %102 = tpu.matmul %101, %100, %cst_103 {dimension_numbers = #tpu.dot_dimension_numbers<[1], [0], [0], [1], [0, 0, 1, 1], [], []>} : vector<16x32xf32>, vector<32x32xf32>, vector<16x32xf32> -> vector<16x32xf32>
    %c0_104 = arith.constant 0 : index
    %c0_105 = arith.constant 0 : index
    %103 = vector.load %arg0[%c0_104, %c0_105] : memref<16x32xf32, #tpu.memory_space<vmem>>, vector<16x32xf32>
    %cst_106 = arith.constant 2.000000e-01 : f32
    %104 = vector.broadcast %cst_106 : f32 to vector<16x32xf32>
    %105 = arith.mulf %104, %102 : vector<16x32xf32>
    %cst_107 = arith.constant 0.000000e+00 : f32
    %106 = vector.broadcast %cst_107 : f32 to vector<16x32xf32>
    %107 = arith.maximumf %105, %106 : vector<16x32xf32>
    %108 = arith.subf %103, %107 : vector<16x32xf32>
    %c0_108 = arith.constant 0 : index
    %c0_109 = arith.constant 0 : index
    %109 = vector.load %arg4[%c0_108, %c0_109] : memref<16x32xf32, #tpu.memory_space<vmem>>, vector<16x32xf32>
    tpu.vector_store %arg4[%c0_108, %c0_109], %108 {strides = array<i32>} : memref<16x32xf32, #tpu.memory_space<vmem>>, vector<16x32xf32>,
    %c0_110 = arith.constant 0 : index
    %c0_111 = arith.constant 0 : index
    %110 = vector.load %arg6[%c0_110, %c0_111] : memref<16x32xf32, #tpu.memory_space<vmem>>, vector<16x32xf32>
    %c0_112 = arith.constant 0 : index
    %c0_113 = arith.constant 0 : index
    %111 = vector.load %arg5[%c0_112, %c0_113] : memref<16x32xf32, #tpu.memory_space<vmem>>, vector<16x32xf32>
    tpu.vector_store %arg5[%c0_112, %c0_113], %110 {strides = array<i32>} : memref<16x32xf32, #tpu.memory_space<vmem>>, vector<16x32xf32>,
    %c0_114 = arith.constant 0 : index
    %c0_115 = arith.constant 0 : index
    %112 = vector.load %arg4[%c0_114, %c0_115] : memref<16x32xf32, #tpu.memory_space<vmem>>, vector<16x32xf32>
    %c0_116 = arith.constant 0 : index
    %c0_117 = arith.constant 0 : index
    %113 = vector.load %arg7[%c0_116, %c0_117] : memref<16x32xf32, #tpu.memory_space<vmem>>, vector<16x32xf32>
    tpu.vector_store %arg7[%c0_116, %c0_117], %112 {strides = array<i32>} : memref<16x32xf32, #tpu.memory_space<vmem>>, vector<16x32xf32>,
    %c0_118 = arith.constant 0 : index
    %c0_119 = arith.constant 0 : index
    %114 = vector.load %arg5[%c0_118, %c0_119] : memref<16x32xf32, #tpu.memory_space<vmem>>, vector<16x32xf32>
    %c0_120 = arith.constant 0 : index
    %c0_121 = arith.constant 0 : index
    %115 = vector.load %arg8[%c0_120, %c0_121] : memref<16x32xf32, #tpu.memory_space<vmem>>, vector<16x32xf32>
    tpu.vector_store %arg8[%c0_120, %c0_121], %114 {strides = array<i32>} : memref<16x32xf32, #tpu.memory_space<vmem>>, vector<16x32xf32>,
    %c0_i32_122 = arith.constant 0 : i32
    %c8_i32_123 = arith.constant 8 : i32
    %116 = arith.muli %c0_i32_122, %c8_i32_123 : i32
    %117 = tpu.assume_multiple %116, 8 : i32
    %118 = arith.index_cast %117 : i32 to index
    %c0_124 = arith.constant 0 : index
    %119 = vector.load %arg7[%118, %c0_124] : memref<16x32xf32, #tpu.memory_space<vmem>>, vector<8x32xf32>
    %c0_125 = arith.constant 0 : index
    %c0_126 = arith.constant 0 : index
    %120 = vector.load %arg7[%c0_125, %c0_126] : memref<16x32xf32, #tpu.memory_space<vmem>>, vector<16x32xf32>
    %cst_127 = arith.constant dense<0.000000e+00> : vector<8x16xf32>
    %121 = tpu.matmul %119, %120, %cst_127 {dimension_numbers = #tpu.dot_dimension_numbers<[1], [1], [0], [0], [0, 0, 1, 0], [], []>} : vector<8x32xf32>, vector<16x32xf32>, vector<8x16xf32> -> vector<8x16xf32>
    %cst_128 = arith.constant -0.138888896 : f32
    %122 = vector.broadcast %cst_128 : f32 to vector<8x16xf32>
    %123 = arith.mulf %122, %121 : vector<8x16xf32>
    %cst_129 = arith.constant 0.000000e+00 : f32
    %124 = vector.broadcast %cst_129 : f32 to vector<8x16xf32>
    %125 = arith.maximumf %123, %124 : vector<8x16xf32>
    %126 = arith.index_cast %117 : i32 to index
    %c0_130 = arith.constant 0 : index
    %127 = vector.load %arg2[%126, %c0_130] : memref<16x16xf32, #tpu.memory_space<vmem>>, vector<8x16xf32>
    %128 = arith.addf %125, %127 : vector<8x16xf32>
    %c0_131 = arith.constant 0 : index
    %c0_132 = arith.constant 0 : index
    %129 = vector.load %arg8[%c0_131, %c0_132] : memref<16x32xf32, #tpu.memory_space<vmem>>, vector<16x32xf32>
    %cst_133 = arith.constant dense<0.000000e+00> : vector<8x32xf32>
    %130 = tpu.matmul %128, %129, %cst_133 {dimension_numbers = #tpu.dot_dimension_numbers<[1], [0], [0], [1], [0, 0, 1, 1], [], []>} : vector<8x16xf32>, vector<16x32xf32>, vector<8x32xf32> -> vector<8x32xf32>
    %131 = arith.index_cast %117 : i32 to index
    %c0_134 = arith.constant 0 : index
    %132 = vector.load %arg6[%131, %c0_134] : memref<16x32xf32, #tpu.memory_space<vmem>>, vector<8x32xf32>
    tpu.vector_store %arg6[%131, %c0_134], %130 {strides = array<i32>} : memref<16x32xf32, #tpu.memory_space<vmem>>, vector<8x32xf32>,
    %c1_i32_135 = arith.constant 1 : i32
    %c8_i32_136 = arith.constant 8 : i32
    %133 = arith.muli %c1_i32_135, %c8_i32_136 : i32
    %134 = tpu.assume_multiple %133, 8 : i32
    %135 = arith.index_cast %134 : i32 to index
    %c0_137 = arith.constant 0 : index
    %136 = vector.load %arg7[%135, %c0_137] : memref<16x32xf32, #tpu.memory_space<vmem>>, vector<8x32xf32>
    %c0_138 = arith.constant 0 : index
    %c0_139 = arith.constant 0 : index
    %137 = vector.load %arg7[%c0_138, %c0_139] : memref<16x32xf32, #tpu.memory_space<vmem>>, vector<16x32xf32>
    %cst_140 = arith.constant dense<0.000000e+00> : vector<8x16xf32>
    %138 = tpu.matmul %136, %137, %cst_140 {dimension_numbers = #tpu.dot_dimension_numbers<[1], [1], [0], [0], [0, 0, 1, 0], [], []>} : vector<8x32xf32>, vector<16x32xf32>, vector<8x16xf32> -> vector<8x16xf32>
    %cst_141 = arith.constant -0.138888896 : f32
    %139 = vector.broadcast %cst_141 : f32 to vector<8x16xf32>
    %140 = arith.mulf %139, %138 : vector<8x16xf32>
    %cst_142 = arith.constant 0.000000e+00 : f32
    %141 = vector.broadcast %cst_142 : f32 to vector<8x16xf32>
    %142 = arith.maximumf %140, %141 : vector<8x16xf32>
    %143 = arith.index_cast %134 : i32 to index
    %c0_143 = arith.constant 0 : index
    %144 = vector.load %arg2[%143, %c0_143] : memref<16x16xf32, #tpu.memory_space<vmem>>, vector<8x16xf32>
    %145 = arith.addf %142, %144 : vector<8x16xf32>
    %c0_144 = arith.constant 0 : index
    %c0_145 = arith.constant 0 : index
    %146 = vector.load %arg8[%c0_144, %c0_145] : memref<16x32xf32, #tpu.memory_space<vmem>>, vector<16x32xf32>
    %cst_146 = arith.constant dense<0.000000e+00> : vector<8x32xf32>
    %147 = tpu.matmul %145, %146, %cst_146 {dimension_numbers = #tpu.dot_dimension_numbers<[1], [0], [0], [1], [0, 0, 1, 1], [], []>} : vector<8x16xf32>, vector<16x32xf32>, vector<8x32xf32> -> vector<8x32xf32>
    %148 = arith.index_cast %134 : i32 to index
    %c0_147 = arith.constant 0 : index
    %149 = vector.load %arg6[%148, %c0_147] : memref<16x32xf32, #tpu.memory_space<vmem>>, vector<8x32xf32>
    tpu.vector_store %arg6[%148, %c0_147], %147 {strides = array<i32>} : memref<16x32xf32, #tpu.memory_space<vmem>>, vector<8x32xf32>,
    %c2_i32_148 = arith.constant 2 : i32
    %c0_149 = arith.constant 0 : index
    %c0_150 = arith.constant 0 : index
    %150 = vector.load %arg8[%c0_149, %c0_150] : memref<16x32xf32, #tpu.memory_space<vmem>>, vector<16x32xf32>
    %c0_151 = arith.constant 0 : index
    %c0_152 = arith.constant 0 : index
    %151 = vector.load %arg7[%c0_151, %c0_152] : memref<16x32xf32, #tpu.memory_space<vmem>>, vector<16x32xf32>
    %cst_153 = arith.constant dense<0.000000e+00> : vector<32x32xf32>
    %152 = tpu.matmul %150, %151, %cst_153 {dimension_numbers = #tpu.dot_dimension_numbers<[0], [0], [1], [1], [0, 1, 1, 1], [], []>} : vector<16x32xf32>, vector<16x32xf32>, vector<32x32xf32> -> vector<32x32xf32>
    %c0_154 = arith.constant 0 : index
    %c0_155 = arith.constant 0 : index
    %153 = vector.load %arg3[%c0_154, %c0_155] : memref<32x32xf32, #tpu.memory_space<vmem>>, vector<32x32xf32>
    %cst_156 = arith.constant dense<0.000000e+00> : vector<32x32xf32>
    %154 = tpu.matmul %152, %153, %cst_156 {dimension_numbers = #tpu.dot_dimension_numbers<[1], [0], [0], [1], [0, 0, 1, 1], [], []>} : vector<32x32xf32>, vector<32x32xf32>, vector<32x32xf32> -> vector<32x32xf32>
    %c0_157 = arith.constant 0 : index
    %c0_158 = arith.constant 0 : index
    %155 = vector.load %arg8[%c0_157, %c0_158] : memref<16x32xf32, #tpu.memory_space<vmem>>, vector<16x32xf32>
    %cst_159 = arith.constant dense<0.000000e+00> : vector<16x32xf32>
    %156 = tpu.matmul %155, %154, %cst_159 {dimension_numbers = #tpu.dot_dimension_numbers<[1], [0], [0], [1], [0, 0, 1, 1], [], []>} : vector<16x32xf32>, vector<32x32xf32>, vector<16x32xf32> -> vector<16x32xf32>
    %c0_160 = arith.constant 0 : index
    %c0_161 = arith.constant 0 : index
    %157 = vector.load %arg0[%c0_160, %c0_161] : memref<16x32xf32, #tpu.memory_space<vmem>>, vector<16x32xf32>
    %cst_162 = arith.constant 2.000000e-01 : f32
    %158 = vector.broadcast %cst_162 : f32 to vector<16x32xf32>
    %159 = arith.mulf %158, %156 : vector<16x32xf32>
    %cst_163 = arith.constant 0.000000e+00 : f32
    %160 = vector.broadcast %cst_163 : f32 to vector<16x32xf32>
    %161 = arith.maximumf %159, %160 : vector<16x32xf32>
    %162 = arith.subf %157, %161 : vector<16x32xf32>
    %c0_164 = arith.constant 0 : index
    %c0_165 = arith.constant 0 : index
    %163 = vector.load %arg4[%c0_164, %c0_165] : memref<16x32xf32, #tpu.memory_space<vmem>>, vector<16x32xf32>
    tpu.vector_store %arg4[%c0_164, %c0_165], %162 {strides = array<i32>} : memref<16x32xf32, #tpu.memory_space<vmem>>, vector<16x32xf32>,
    %c0_166 = arith.constant 0 : index
    %c0_167 = arith.constant 0 : index
    %164 = vector.load %arg6[%c0_166, %c0_167] : memref<16x32xf32, #tpu.memory_space<vmem>>, vector<16x32xf32>
    %c0_168 = arith.constant 0 : index
    %c0_169 = arith.constant 0 : index
    %165 = vector.load %arg5[%c0_168, %c0_169] : memref<16x32xf32, #tpu.memory_space<vmem>>, vector<16x32xf32>
    tpu.vector_store %arg5[%c0_168, %c0_169], %164 {strides = array<i32>} : memref<16x32xf32, #tpu.memory_space<vmem>>, vector<16x32xf32>,
    return
  }
}

</mosaic_0001>

<llo_original>
// kernel: tpu_custom_call.1
$region0: #{tpu_custom_call.1}
  #allocation0 [shape = 'u32[]', space=smem, size = 0x4, offset = 0x4, fixed_abs, tag = 'smem constant byte address 0x4 - core index']
  #allocation1 [shape = 'u32[144,128]{1,0:T(1,128)}', space=vmem, size = 0x12000, scoped, tag = 'internal scratch']
  #allocation2 [shape = 'f32[16,32]{1,0:T(8,128)}', space=vmem, size = 0x2000, scoped, tag = 'scratch operand']
  #allocation3 [shape = 'f32[16,32]{1,0:T(8,128)}', space=vmem, size = 0x2000, scoped, tag = 'scratch operand']
  #allocation4 [shape = 'f32[16,32]{1,0:T(8,128)}', space=vmem, size = 0x2000, scoped, tag = 'scratch operand']
  %s0 = inlined_call_operand.hbm [shape: f32[16,32], index: 0, kind: input, shape index: {}]
  %s1 = inlined_call_operand.hbm [shape: f32[16,32], index: 1, kind: input, shape index: {}]
  %s2 = inlined_call_operand.hbm [shape: f32[16,16], index: 2, kind: input, shape index: {}]
  %s3 = inlined_call_operand.hbm [shape: f32[32,32], index: 3, kind: input, shape index: {}]
  %s4 = inlined_call_operand.hbm [shape: f32[16,32], index: 4, kind: output, shape index: {0}]
  %s5 = inlined_call_operand.hbm [shape: f32[16,32], index: 5, kind: output, shape index: {1}]
  %6 = xla_tuple %s4, %s5
  %s7 = sld [smem:[#allocation0]]
  $region50: #{tpu_custom_call.1} parent=0
    _
  %s9 = ssub.s32 1, %s7
  %s10 = scalar_select 0, %s9, %s7
  $region1: #{tpu_custom_call.1} parent=0
    #allocation5 [shape = 'u8[8192]{0}', space=vmem, size = 0x2000, scoped, tag = 'input window, operand 0, single buffered']
    #allocation6 [shape = 's32[1]{0}', space=sflag, size = 0x4, scoped, tag = 'scoped memory for tpu_custom_call.1']
    #allocation7 [shape = 's32[1]{0}', space=sflag, size = 0x4, scoped, tag = 'scoped memory for tpu_custom_call.1']
    #allocation8 [shape = 'u8[8192]{0}', space=vmem, size = 0x2000, scoped, tag = 'input window, operand 1, single buffered']
    #allocation9 [shape = 's32[1]{0}', space=sflag, size = 0x4, scoped, tag = 'scoped memory for tpu_custom_call.1']
    #allocation10 [shape = 'u8[8192]{0}', space=vmem, size = 0x2000, scoped, tag = 'input window, operand 2, single buffered']
    #allocation11 [shape = 'u8[16384]{0}', space=vmem, size = 0x4000, scoped, tag = 'input window, operand 3, single buffered']
    #allocation12 [shape = 's32[1]{0}', space=sflag, size = 0x4, scoped, tag = 'scoped memory for tpu_custom_call.1']
    #allocation13 [shape = 'u8[8192]{0}', space=vmem, size = 0x2000, scoped, tag = 'output window, operand 0, single buffered']
    #allocation14 [shape = 'u8[8192]{0}', space=vmem, size = 0x2000, scoped, tag = 'output window, operand 1, single buffered']
    #allocation15 [shape = 's32[1]{0}', space=sflag, size = 0x4, scoped, tag = 'scoped memory for tpu_custom_call.1']
    %11 = vsyncpa [#allocation6], 0
    %12 = vsyncpa [#allocation9], 0
    %13 = vsyncpa [#allocation12], 0
    %14 = vsyncpa [#allocation7], 0
    %15 = vsyncpa [#allocation15], 0
    // Predicated region
    $region2: #{tpu_custom_call.1} parent=1 // pred_check
      _
    $region3: #{tpu_custom_call.1} parent=1 // pred_check_branch
      %17 = sbr.rel (0) target = $region5
    $region4: #{tpu_custom_call.1} parent=1 // pred_region
      %s19 = ssub.s32 256, 256
      %20 = vsyncadd [#allocation6], %s19
      %s21 = sshll.u32 [#allocation5], 4
      %s22 = int_to_ptr.vmem [resolvable:$true] %s21
      %27 = dma.hbm_to_vmem [thread:$0]  %s0, 256, %s22, [#allocation6], 128, 128, 8
    $region5: #{tpu_custom_call.1} parent=1 // pred_fallthru
      _
    // Predicated region
    $region6: #{tpu_custom_call.1} parent=1 // pred_check
      _
    $region7: #{tpu_custom_call.1} parent=1 // pred_check_branch
      %29 = sbr.rel (0) target = $region9
    $region8: #{tpu_custom_call.1} parent=1 // pred_region
      %s31 = ssub.s32 256, 256
      %32 = vsyncadd [#allocation9], %s31
      %s33 = sshll.u32 [#allocation8], 4
      %s34 = int_to_ptr.vmem [resolvable:$true] %s33
      %39 = dma.hbm_to_vmem [thread:$0]  %s1, 256, %s34, [#allocation9], 128, 128, 8
    $region9: #{tpu_custom_call.1} parent=1 // pred_fallthru
      _
    // Predicated region
    $region10: #{tpu_custom_call.1} parent=1 // pred_check
      _
    $region11: #{tpu_custom_call.1} parent=1 // pred_check_branch
      %41 = sbr.rel (0) target = $region13
    $region12: #{tpu_custom_call.1} parent=1 // pred_region
      %s43 = ssub.s32 256, 256
      %44 = vsyncadd [#allocation9], %s43
      %s45 = sshll.u32 [#allocation10], 4
      %s46 = int_to_ptr.vmem [resolvable:$true] %s45
      %51 = dma.hbm_to_vmem [thread:$0]  %s2, 256, %s46, [#allocation9], 128, 128, 8
    $region13: #{tpu_custom_call.1} parent=1 // pred_fallthru
      _
    // Predicated region
    $region14: #{tpu_custom_call.1} parent=1 // pred_check
      _
    $region15: #{tpu_custom_call.1} parent=1 // pred_check_branch
      %53 = sbr.rel (0) target = $region17
    $region16: #{tpu_custom_call.1} parent=1 // pred_region
      %s55 = ssub.s32 512, 512
      %56 = vsyncadd [#allocation12], %s55
      %s57 = sshll.u32 [#allocation11], 4
      %s58 = int_to_ptr.vmem [resolvable:$true] %s57
      %63 = dma.hbm_to_vmem [thread:$0]  %s3, 512, %s58, [#allocation12], 128, 128, 8
    $region17: #{tpu_custom_call.1} parent=1 // pred_fallthru
      _
    // Predicated region
    $region18: #{tpu_custom_call.1} parent=1 // pred_check
      _
    $region19: #{tpu_custom_call.1} parent=1 // pred_check_branch
      %65 = sbr.rel (0) target = $region21
    $region20: #{tpu_custom_call.1} parent=1 // pred_region
      %66 = dma.done [#allocation6], 256
    $region21: #{tpu_custom_call.1} parent=1 // pred_fallthru
      _
    // Predicated region
    $region22: #{tpu_custom_call.1} parent=1 // pred_check
      _
    $region23: #{tpu_custom_call.1} parent=1 // pred_check_branch
      %68 = sbr.rel (0) target = $region25
    $region24: #{tpu_custom_call.1} parent=1 // pred_region
      %69 = dma.done [#allocation9], 256
    $region25: #{tpu_custom_call.1} parent=1 // pred_fallthru
      _
    // Predicated region
    $region26: #{tpu_custom_call.1} parent=1 // pred_check
      _
    $region27: #{tpu_custom_call.1} parent=1 // pred_check_branch
      %71 = sbr.rel (0) target = $region29
    $region28: #{tpu_custom_call.1} parent=1 // pred_region
      %72 = dma.done [#allocation9], 256
    $region29: #{tpu_custom_call.1} parent=1 // pred_fallthru
      _
    // Predicated region
    $region30: #{tpu_custom_call.1} parent=1 // pred_check
      _
    $region31: #{tpu_custom_call.1} parent=1 // pred_check_branch
      %74 = sbr.rel (0) target = $region33
    $region32: #{tpu_custom_call.1} parent=1 // pred_region
      %75 = dma.done [#allocation12], 512
    $region33: #{tpu_custom_call.1} parent=1 // pred_fallthru
      _
    %v76 = vld [vmem:[#allocation8] sm:$0xff]
    %v77 = vld [vmem:[#allocation8 + $0x8] sm:$0xff]
    %vm78 = vcmask 261120
    %79 = vst.msk [vmem:[#allocation13] sm:$0xff] %vm78, %v76
    %80 = vst.msk [vmem:[#allocation13 + $0x8] sm:$0xff] %vm78, %v77
    %v81 = vld [vmem:[#allocation5] sm:$0xff]
    %v82 = vld [vmem:[#allocation5 + $0x8] sm:$0xff]
    %83 = vst.msk [vmem:[#allocation14] sm:$0xff] %vm78, %v81
    %84 = vst.msk [vmem:[#allocation14 + $0x8] sm:$0xff] %vm78, %v82
    %v85 = vld [vmem:[#allocation13] sm:$0xff]
    %v86 = vld [vmem:[#allocation13 + $0x8] sm:$0xff]
    %87 = vst.msk [vmem:[#allocation3] sm:$0xff] %vm78, %v85
    %88 = vst.msk [vmem:[#allocation3 + $0x8] sm:$0xff] %vm78, %v86
    %v89 = vld [vmem:[#allocation14] sm:$0xff]
    %v90 = vld [vmem:[#allocation14 + $0x8] sm:$0xff]
    %91 = vst.msk [vmem:[#allocation4] sm:$0xff] %vm78, %v89
    %92 = vst.msk [vmem:[#allocation4 + $0x8] sm:$0xff] %vm78, %v90
    %v93 = vld [vmem:[#allocation3] sm:$0xff]
    %v94 = vld [vmem:[#allocation3] sm:$0xff]
    %v95 = vld [vmem:[#allocation3 + $0x8] sm:$0xff]
    %v97 = vsel %vm78, %v93, 0
    %v100 = vsel %vm78, %v94, 0
    %v103 = vsel %vm78, %v95, 0
    %105 = vmatprep.subr.mxu0 0.0
    %106 = vmatpush1.xpose.msra.mxu0 0.0
    %107 = vmatprep.subr.mxu0 0.0
    %108 = vmatpush1.xpose.msra.mxu0 0.0
    %109 = vmatprep.subr.mxu0 0.0
    %110 = vmatpush1.xpose.msra.mxu0 0.0
    %111 = vmatprep.subr.mxu0 0.0
    %112 = vmatpush1.xpose.msra.mxu0 0.0
    %113 = vmatprep.subr.mxu0 0.0
    %114 = vmatpush1.xpose.msra.mxu0 0.0
    %115 = vmatprep.subr.mxu0 0.0
    %116 = vmatpush1.xpose.msra.mxu0 0.0
    %117 = vmatprep.subr.mxu0 0.0
    %118 = vmatpush1.xpose.msra.mxu0 0.0
    %119 = vmatprep.subr.mxu0 0.0
    %120 = vmatpush1.xpose.msra.mxu0 0.0
    %121 = vmatprep.subr.mxu0 0.0
    %122 = vmatpush1.xpose.msra.mxu0 0.0
    %123 = vmatprep.subr.mxu0 0.0
    %124 = vmatpush1.xpose.msra.mxu0 0.0
    %125 = vmatprep.subr.mxu0 0.0
    %126 = vmatpush1.xpose.msra.mxu0 0.0
    %127 = vmatprep.subr.mxu0 0.0
    %128 = vmatpush1.xpose.msra.mxu0 0.0
    %129 = vmatprep.subr.mxu0 0.0
    %130 = vmatpush1.xpose.msra.mxu0 0.0
    %131 = vmatprep.subr.mxu0 0.0
    %132 = vmatpush1.xpose.msra.mxu0 0.0
    %133 = vmatprep.subr.mxu0 0.0
    %134 = vmatpush1.xpose.msra.mxu0 %v103
    %135 = vmatprep.subr.mxu0 0.0
    %136 = vmatpush1.xpose.msra.mxu0 %v100
    %137 = vmatprep.subr.mxu0 0.0
    %138 = vmatpush2.xpose.msra.mxu0 0.0
    %139 = vmatprep.subr.mxu0 0.0
    %140 = vmatpush2.xpose.msra.mxu0 0.0
    %141 = vmatprep.subr.mxu0 0.0
    %142 = vmatpush2.xpose.msra.mxu0 0.0
    %143 = vmatprep.subr.mxu0 0.0
    %144 = vmatpush2.xpose.msra.mxu0 0.0
    %145 = vmatprep.subr.mxu0 0.0
    %146 = vmatpush2.xpose.msra.mxu0 0.0
    %147 = vmatprep.subr.mxu0 0.0
    %148 = vmatpush2.xpose.msra.mxu0 0.0
    %149 = vmatprep.subr.mxu0 0.0
    %150 = vmatpush2.xpose.msra.mxu0 0.0
    %151 = vmatprep.subr.mxu0 0.0
    %152 = vmatpush2.xpose.msra.mxu0 0.0
    %153 = vmatprep.subr.mxu0 0.0
    %154 = vmatpush2.xpose.msra.mxu0 0.0
    %155 = vmatprep.subr.mxu0 0.0
    %156 = vmatpush2.xpose.msra.mxu0 0.0
    %157 = vmatprep.subr.mxu0 0.0
    %158 = vmatpush2.xpose.msra.mxu0 0.0
    %159 = vmatprep.subr.mxu0 0.0
    %160 = vmatpush2.xpose.msra.mxu0 0.0
    %161 = vmatprep.subr.mxu0 0.0
    %162 = vmatpush2.xpose.msra.mxu0 0.0
    %163 = vmatprep.subr.mxu0 0.0
    %164 = vmatpush2.xpose.msra.mxu0 0.0
    %165 = vmatprep.subr.mxu0 0.0
    %166 = vmatpush2.xpose.msra.mxu0 0.0
    %167 = vmatprep.subr.mxu0 0.0
    %168 = vmatpush2.xpose.msra.mxu0 0.0
    %169 = vmatprep.mubr.f32.mxu0 0.0
    %170 = vmatmul.mubr.f32.gmra.mxu0 %v97
    %v171 = vpop.f32.mrf.mxu0
    %v172 = vadd.f32 0.0, %v171
    %v173 = vpop.f32.mrf.mxu0
    %174 = vdwg.mxu0
    %v175 = vmul.f32 %v172, -0.1388889
    %v176 = vmax.f32 %v175, 0.0
    %v177 = vld [vmem:[#allocation10] sm:$0xff]
    %v178 = vadd.f32 %v176, %v177
    %v179 = vld [vmem:[#allocation4] sm:$0xff]
    %v180 = vld [vmem:[#allocation4 + $0x8] sm:$0xff]
    %vm181 = vcmask 130048
    %v183 = vsel %vm181, %v178, 0
    %185 = vmatprep.subr.mxu0 0.0
    %186 = vmatpush1.msra.mxu0 0.0
    %187 = vmatprep.subr.mxu0 0.0
    %188 = vmatpush1.msra.mxu0 0.0
    %189 = vmatprep.subr.mxu0 0.0
    %190 = vmatpush1.msra.mxu0 0.0
    %191 = vmatprep.subr.mxu0 0.0
    %192 = vmatpush1.msra.mxu0 0.0
    %193 = vmatprep.subr.mxu0 0.0
    %194 = vmatpush1.msra.mxu0 0.0
    %195 = vmatprep.subr.mxu0 0.0
    %196 = vmatpush1.msra.mxu0 0.0
    %197 = vmatprep.subr.mxu0 0.0
    %198 = vmatpush1.msra.mxu0 0.0
    %199 = vmatprep.subr.mxu0 0.0
    %200 = vmatpush1.msra.mxu0 0.0
    %201 = vmatprep.subr.mxu0 0.0
    %202 = vmatpush1.msra.mxu0 0.0
    %203 = vmatprep.subr.mxu0 0.0
    %204 = vmatpush1.msra.mxu0 0.0
    %205 = vmatprep.subr.mxu0 0.0
    %206 = vmatpush1.msra.mxu0 0.0
    %207 = vmatprep.subr.mxu0 0.0
    %208 = vmatpush1.msra.mxu0 0.0
    %209 = vmatprep.subr.mxu0 0.0
    %210 = vmatpush1.msra.mxu0 0.0
    %211 = vmatprep.subr.mxu0 0.0
    %212 = vmatpush1.msra.mxu0 0.0
    %213 = vmatprep.subr.mxu0 0.0
    %214 = vmatpush1.msra.mxu0 %v180
    %215 = vmatprep.subr.mxu0 0.0
    %216 = vmatpush1.msra.mxu0 %v179
    %217 = vmatprep.subr.mxu0 0.0
    %218 = vmatpush2.msra.mxu0 0.0
    %219 = vmatprep.subr.mxu0 0.0
    %220 = vmatpush2.msra.mxu0 0.0
    %221 = vmatprep.subr.mxu0 0.0
    %222 = vmatpush2.msra.mxu0 0.0
    %223 = vmatprep.subr.mxu0 0.0
    %224 = vmatpush2.msra.mxu0 0.0
    %225 = vmatprep.subr.mxu0 0.0
    %226 = vmatpush2.msra.mxu0 0.0
    %227 = vmatprep.subr.mxu0 0.0
    %228 = vmatpush2.msra.mxu0 0.0
    %229 = vmatprep.subr.mxu0 0.0
    %230 = vmatpush2.msra.mxu0 0.0
    %231 = vmatprep.subr.mxu0 0.0
    %232 = vmatpush2.msra.mxu0 0.0
    %233 = vmatprep.subr.mxu0 0.0
    %234 = vmatpush2.msra.mxu0 0.0
    %235 = vmatprep.subr.mxu0 0.0
    %236 = vmatpush2.msra.mxu0 0.0
    %237 = vmatprep.subr.mxu0 0.0
    %238 = vmatpush2.msra.mxu0 0.0
    %239 = vmatprep.subr.mxu0 0.0
    %240 = vmatpush2.msra.mxu0 0.0
    %241 = vmatprep.subr.mxu0 0.0
    %242 = vmatpush2.msra.mxu0 0.0
    %243 = vmatprep.subr.mxu0 0.0
    %244 = vmatpush2.msra.mxu0 0.0
    %245 = vmatprep.subr.mxu0 0.0
    %246 = vmatpush2.msra.mxu0 0.0
    %247 = vmatprep.subr.mxu0 0.0
    %248 = vmatpush2.msra.mxu0 0.0
    %249 = vmatprep.mubr.f32.mxu0 0.0
    %250 = vmatmul.mubr.f32.gmra.mxu0 %v183
    %v251 = vpop.f32.mrf.mxu0
    %v252 = vadd.f32 0.0, %v251
    %v253 = vpop.f32.mrf.mxu0
    %254 = vdwg.mxu0
    %255 = vst.msk [vmem:[#allocation2] sm:$0xff] %vm78, %v252
    %s256 = scalar_lea.vmem [#allocation3], 8
    %v257 = vld [vmem:[%s256] sm:$0xff]
    %v258 = vld [vmem:[#allocation3] sm:$0xff]
    %v259 = vld [vmem:[#allocation3 + $0x8] sm:$0xff]
    %v261 = vsel %vm78, %v257, 0
    %v264 = vsel %vm78, %v258, 0
    %v267 = vsel %vm78, %v259, 0
    %269 = vmatprep.subr.mxu0 0.0
    %270 = vmatpush1.xpose.msra.mxu0 0.0
    %271 = vmatprep.subr.mxu0 0.0
    %272 = vmatpush1.xpose.msra.mxu0 0.0
    %273 = vmatprep.subr.mxu0 0.0
    %274 = vmatpush1.xpose.msra.mxu0 0.0
    %275 = vmatprep.subr.mxu0 0.0
    %276 = vmatpush1.xpose.msra.mxu0 0.0
    %277 = vmatprep.subr.mxu0 0.0
    %278 = vmatpush1.xpose.msra.mxu0 0.0
    %279 = vmatprep.subr.mxu0 0.0
    %280 = vmatpush1.xpose.msra.mxu0 0.0
    %281 = vmatprep.subr.mxu0 0.0
    %282 = vmatpush1.xpose.msra.mxu0 0.0
    %283 = vmatprep.subr.mxu0 0.0
    %284 = vmatpush1.xpose.msra.mxu0 0.0
    %285 = vmatprep.subr.mxu0 0.0
    %286 = vmatpush1.xpose.msra.mxu0 0.0
    %287 = vmatprep.subr.mxu0 0.0
    %288 = vmatpush1.xpose.msra.mxu0 0.0
    %289 = vmatprep.subr.mxu0 0.0
    %290 = vmatpush1.xpose.msra.mxu0 0.0
    %291 = vmatprep.subr.mxu0 0.0
    %292 = vmatpush1.xpose.msra.mxu0 0.0
    %293 = vmatprep.subr.mxu0 0.0
    %294 = vmatpush1.xpose.msra.mxu0 0.0
    %295 = vmatprep.subr.mxu0 0.0
    %296 = vmatpush1.xpose.msra.mxu0 0.0
    %297 = vmatprep.subr.mxu0 0.0
    %298 = vmatpush1.xpose.msra.mxu0 %v267
    %299 = vmatprep.subr.mxu0 0.0
    %300 = vmatpush1.xpose.msra.mxu0 %v264
    %301 = vmatprep.subr.mxu0 0.0
    %302 = vmatpush2.xpose.msra.mxu0 0.0
    %303 = vmatprep.subr.mxu0 0.0
    %304 = vmatpush2.xpose.msra.mxu0 0.0
    %305 = vmatprep.subr.mxu0 0.0
    %306 = vmatpush2.xpose.msra.mxu0 0.0
    %307 = vmatprep.subr.mxu0 0.0
    %308 = vmatpush2.xpose.msra.mxu0 0.0
    %309 = vmatprep.subr.mxu0 0.0
    %310 = vmatpush2.xpose.msra.mxu0 0.0
    %311 = vmatprep.subr.mxu0 0.0
    %312 = vmatpush2.xpose.msra.mxu0 0.0
    %313 = vmatprep.subr.mxu0 0.0
    %314 = vmatpush2.xpose.msra.mxu0 0.0
    %315 = vmatprep.subr.mxu0 0.0
    %316 = vmatpush2.xpose.msra.mxu0 0.0
    %317 = vmatprep.subr.mxu0 0.0
    %318 = vmatpush2.xpose.msra.mxu0 0.0
    %319 = vmatprep.subr.mxu0 0.0
    %320 = vmatpush2.xpose.msra.mxu0 0.0
    %321 = vmatprep.subr.mxu0 0.0
    %322 = vmatpush2.xpose.msra.mxu0 0.0
    %323 = vmatprep.subr.mxu0 0.0
    %324 = vmatpush2.xpose.msra.mxu0 0.0
    %325 = vmatprep.subr.mxu0 0.0
    %326 = vmatpush2.xpose.msra.mxu0 0.0
    %327 = vmatprep.subr.mxu0 0.0
    %328 = vmatpush2.xpose.msra.mxu0 0.0
    %329 = vmatprep.subr.mxu0 0.0
    %330 = vmatpush2.xpose.msra.mxu0 0.0
    %331 = vmatprep.subr.mxu0 0.0
    %332 = vmatpush2.xpose.msra.mxu0 0.0
    %333 = vmatprep.mubr.f32.mxu0 0.0
    %334 = vmatmul.mubr.f32.gmra.mxu0 %v261
    %v335 = vpop.f32.mrf.mxu0
    %v336 = vadd.f32 0.0, %v335
    %v337 = vpop.f32.mrf.mxu0
    %338 = vdwg.mxu0
    %v339 = vmul.f32 %v336, -0.1388889
    %v340 = vmax.f32 %v339, 0.0
    %s341 = scalar_lea.vmem [#allocation10], 8
    %v342 = vld [vmem:[%s341] sm:$0xff]
    %v343 = vadd.f32 %v340, %v342
    %v344 = vld [vmem:[#allocation4] sm:$0xff]
    %v345 = vld [vmem:[#allocation4 + $0x8] sm:$0xff]
    %v347 = vsel %vm181, %v343, 0
    %349 = vmatprep.subr.mxu0 0.0
    %350 = vmatpush1.msra.mxu0 0.0
    %351 = vmatprep.subr.mxu0 0.0
    %352 = vmatpush1.msra.mxu0 0.0
    %353 = vmatprep.subr.mxu0 0.0
    %354 = vmatpush1.msra.mxu0 0.0
    %355 = vmatprep.subr.mxu0 0.0
    %356 = vmatpush1.msra.mxu0 0.0
    %357 = vmatprep.subr.mxu0 0.0
    %358 = vmatpush1.msra.mxu0 0.0
    %359 = vmatprep.subr.mxu0 0.0
    %360 = vmatpush1.msra.mxu0 0.0
    %361 = vmatprep.subr.mxu0 0.0
    %362 = vmatpush1.msra.mxu0 0.0
    %363 = vmatprep.subr.mxu0 0.0
    %364 = vmatpush1.msra.mxu0 0.0
    %365 = vmatprep.subr.mxu0 0.0
    %366 = vmatpush1.msra.mxu0 0.0
    %367 = vmatprep.subr.mxu0 0.0
    %368 = vmatpush1.msra.mxu0 0.0
    %369 = vmatprep.subr.mxu0 0.0
    %370 = vmatpush1.msra.mxu0 0.0
    %371 = vmatprep.subr.mxu0 0.0
    %372 = vmatpush1.msra.mxu0 0.0
    %373 = vmatprep.subr.mxu0 0.0
    %374 = vmatpush1.msra.mxu0 0.0
    %375 = vmatprep.subr.mxu0 0.0
    %376 = vmatpush1.msra.mxu0 0.0
    %377 = vmatprep.subr.mxu0 0.0
    %378 = vmatpush1.msra.mxu0 %v345
    %379 = vmatprep.subr.mxu0 0.0
    %380 = vmatpush1.msra.mxu0 %v344
    %381 = vmatprep.subr.mxu0 0.0
    %382 = vmatpush2.msra.mxu0 0.0
    %383 = vmatprep.subr.mxu0 0.0
    %384 = vmatpush2.msra.mxu0 0.0
    %385 = vmatprep.subr.mxu0 0.0
    %386 = vmatpush2.msra.mxu0 0.0
    %387 = vmatprep.subr.mxu0 0.0
    %388 = vmatpush2.msra.mxu0 0.0
    %389 = vmatprep.subr.mxu0 0.0
    %390 = vmatpush2.msra.mxu0 0.0
    %391 = vmatprep.subr.mxu0 0.0
    %392 = vmatpush2.msra.mxu0 0.0
    %393 = vmatprep.subr.mxu0 0.0
    %394 = vmatpush2.msra.mxu0 0.0
    %395 = vmatprep.subr.mxu0 0.0
    %396 = vmatpush2.msra.mxu0 0.0
    %397 = vmatprep.subr.mxu0 0.0
    %398 = vmatpush2.msra.mxu0 0.0
    %399 = vmatprep.subr.mxu0 0.0
    %400 = vmatpush2.msra.mxu0 0.0
    %401 = vmatprep.subr.mxu0 0.0
    %402 = vmatpush2.msra.mxu0 0.0
    %403 = vmatprep.subr.mxu0 0.0
    %404 = vmatpush2.msra.mxu0 0.0
    %405 = vmatprep.subr.mxu0 0.0
    %406 = vmatpush2.msra.mxu0 0.0
    %407 = vmatprep.subr.mxu0 0.0
    %408 = vmatpush2.msra.mxu0 0.0
    %409 = vmatprep.subr.mxu0 0.0
    %410 = vmatpush2.msra.mxu0 0.0
    %411 = vmatprep.subr.mxu0 0.0
    %412 = vmatpush2.msra.mxu0 0.0
    %413 = vmatprep.mubr.f32.mxu0 0.0
    %414 = vmatmul.mubr.f32.gmra.mxu0 %v347
    %v415 = vpop.f32.mrf.mxu0
    %v416 = vadd.f32 0.0, %v415
    %v417 = vpop.f32.mrf.mxu0
    %418 = vdwg.mxu0
    %s419 = scalar_lea.vmem [#allocation2], 8
    %420 = vst.msk [vmem:[%s419] sm:$0xff] %vm78, %v416
    %v421 = vld [vmem:[#allocation4] sm:$0xff]
    %v422 = vld [vmem:[#allocation4 + $0x8] sm:$0xff]
    %v423 = vld [vmem:[#allocation3] sm:$0xff]
    %v424 = vld [vmem:[#allocation3 + $0x8] sm:$0xff]
    %425 = vxpose.xlu0.b32.start [1/16] %v421, 128
    %426 = vxpose.xlu0.b32.cont [2/16] %v422, 128
    %427 = vxpose.xlu0.b32.cont [3/16] 0.0, 128
    %428 = vxpose.xlu0.b32.cont [4/16] 0.0, 128
    %429 = vxpose.xlu0.b32.cont [5/16] 0.0, 128
    %430 = vxpose.xlu0.b32.cont [6/16] 0.0, 128
    %431 = vxpose.xlu0.b32.cont [7/16] 0.0, 128
    %432 = vxpose.xlu0.b32.cont [8/16] 0.0, 128
    %433 = vxpose.xlu0.b32.cont [9/16] 0.0, 128
    %434 = vxpose.xlu0.b32.cont [10/16] 0.0, 128
    %435 = vxpose.xlu0.b32.cont [11/16] 0.0, 128
    %436 = vxpose.xlu0.b32.cont [12/16] 0.0, 128
    %437 = vxpose.xlu0.b32.cont [13/16] 0.0, 128
    %438 = vxpose.xlu0.b32.cont [14/16] 0.0, 128
    %439 = vxpose.xlu0.b32.cont [15/16] 0.0, 128
    %440 = vxpose.xlu0.b32.end [16/16] 0.0, 128
    %v441 = vpop.trf.xlu0
    %v442 = vpop.trf.xlu0
    %v443 = vpop.trf.xlu0
    %v444 = vpop.trf.xlu0
    %v445 = vpop.trf.xlu0
    %v446 = vpop.trf.xlu0
    %v447 = vpop.trf.xlu0
    %v448 = vpop.trf.xlu0
    %v449 = vpop.trf.xlu0
    %v450 = vpop.trf.xlu0
    %v451 = vpop.trf.xlu0
    %v452 = vpop.trf.xlu0
    %v453 = vpop.trf.xlu0
    %v454 = vpop.trf.xlu0
    %v455 = vpop.trf.xlu0
    %v456 = vpop.trf.xlu0
    %v458 = vsel %vm181, %v441, 0
    %v461 = vsel %vm181, %v442, 0
    %v464 = vsel %vm181, %v443, 0
    %v467 = vsel %vm181, %v444, 0
    %469 = vmatprep.subr.mxu0 0.0
    %470 = vmatpush1.msra.mxu0 0.0
    %471 = vmatprep.subr.mxu0 0.0
    %472 = vmatpush1.msra.mxu0 0.0
    %473 = vmatprep.subr.mxu0 0.0
    %474 = vmatpush1.msra.mxu0 0.0
    %475 = vmatprep.subr.mxu0 0.0
    %476 = vmatpush1.msra.mxu0 0.0
    %477 = vmatprep.subr.mxu0 0.0
    %478 = vmatpush1.msra.mxu0 0.0
    %479 = vmatprep.subr.mxu0 0.0
    %480 = vmatpush1.msra.mxu0 0.0
    %481 = vmatprep.subr.mxu0 0.0
    %482 = vmatpush1.msra.mxu0 0.0
    %483 = vmatprep.subr.mxu0 0.0
    %484 = vmatpush1.msra.mxu0 0.0
    %485 = vmatprep.subr.mxu0 0.0
    %486 = vmatpush1.msra.mxu0 0.0
    %487 = vmatprep.subr.mxu0 0.0
    %488 = vmatpush1.msra.mxu0 0.0
    %489 = vmatprep.subr.mxu0 0.0
    %490 = vmatpush1.msra.mxu0 0.0
    %491 = vmatprep.subr.mxu0 0.0
    %492 = vmatpush1.msra.mxu0 0.0
    %493 = vmatprep.subr.mxu0 0.0
    %494 = vmatpush1.msra.mxu0 0.0
    %495 = vmatprep.subr.mxu0 0.0
    %496 = vmatpush1.msra.mxu0 0.0
    %497 = vmatprep.subr.mxu0 0.0
    %498 = vmatpush1.msra.mxu0 %v424
    %499 = vmatprep.subr.mxu0 0.0
    %500 = vmatpush1.msra.mxu0 %v423
    %501 = vmatprep.subr.mxu0 0.0
    %502 = vmatpush2.msra.mxu0 0.0
    %503 = vmatprep.subr.mxu0 0.0
    %504 = vmatpush2.msra.mxu0 0.0
    %505 = vmatprep.subr.mxu0 0.0
    %506 = vmatpush2.msra.mxu0 0.0
    %507 = vmatprep.subr.mxu0 0.0
    %508 = vmatpush2.msra.mxu0 0.0
    %509 = vmatprep.subr.mxu0 0.0
    %510 = vmatpush2.msra.mxu0 0.0
    %511 = vmatprep.subr.mxu0 0.0
    %512 = vmatpush2.msra.mxu0 0.0
    %513 = vmatprep.subr.mxu0 0.0
    %514 = vmatpush2.msra.mxu0 0.0
    %515 = vmatprep.subr.mxu0 0.0
    %516 = vmatpush2.msra.mxu0 0.0
    %517 = vmatprep.subr.mxu0 0.0
    %518 = vmatpush2.msra.mxu0 0.0
    %519 = vmatprep.subr.mxu0 0.0
    %520 = vmatpush2.msra.mxu0 0.0
    %521 = vmatprep.subr.mxu0 0.0
    %522 = vmatpush2.msra.mxu0 0.0
    %523 = vmatprep.subr.mxu0 0.0
    %524 = vmatpush2.msra.mxu0 0.0
    %525 = vmatprep.subr.mxu0 0.0
    %526 = vmatpush2.msra.mxu0 0.0
    %527 = vmatprep.subr.mxu0 0.0
    %528 = vmatpush2.msra.mxu0 0.0
    %529 = vmatprep.subr.mxu0 0.0
    %530 = vmatpush2.msra.mxu0 0.0
    %531 = vmatprep.subr.mxu0 0.0
    %532 = vmatpush2.msra.mxu0 0.0
    %533 = vmatprep.mubr.f32.mxu0 0.0
    %534 = vmatmul.mubr.f32.gmra.mxu0 %v458
    %v535 = vpop.f32.mrf.mxu0
    %v536 = vadd.f32 0.0, %v535
    %v537 = vpop.f32.mrf.mxu0
    %538 = vmatprep.mubr.f32.mxu0 0.0
    %539 = vmatmul.mubr.f32.gmra.mxu0 %v461
    %v540 = vpop.f32.mrf.mxu0
    %v541 = vadd.f32 0.0, %v540
    %v542 = vpop.f32.mrf.mxu0
    %543 = vmatprep.mubr.f32.mxu0 0.0
    %544 = vmatmul.mubr.f32.gmra.mxu0 %v464
    %v545 = vpop.f32.mrf.mxu0
    %v546 = vadd.f32 0.0, %v545
    %v547 = vpop.f32.mrf.mxu0
    %548 = vmatprep.mubr.f32.mxu0 0.0
    %549 = vmatmul.mubr.f32.gmra.mxu0 %v467
    %v550 = vpop.f32.mrf.mxu0
    %v551 = vadd.f32 0.0, %v550
    %v552 = vpop.f32.mrf.mxu0
    %553 = vdwg.mxu0
    %v554 = vld [vmem:[#allocation11] sm:$0xff]
    %v555 = vld [vmem:[#allocation11 + $0x8] sm:$0xff]
    %v556 = vld [vmem:[#allocation11 + $0x10] sm:$0xff]
    %v557 = vld [vmem:[#allocation11 + $0x18] sm:$0xff]
    %v559 = vsel %vm78, %v536, 0
    %v562 = vsel %vm78, %v541, 0
    %v565 = vsel %vm78, %v546, 0
    %v568 = vsel %vm78, %v551, 0
    %570 = vmatprep.subr.mxu0 0.0
    %571 = vmatpush1.msra.mxu0 0.0
    %572 = vmatprep.subr.mxu0 0.0
    %573 = vmatpush1.msra.mxu0 0.0
    %574 = vmatprep.subr.mxu0 0.0
    %575 = vmatpush1.msra.mxu0 0.0
    %576 = vmatprep.subr.mxu0 0.0
    %577 = vmatpush1.msra.mxu0 0.0
    %578 = vmatprep.subr.mxu0 0.0
    %579 = vmatpush1.msra.mxu0 0.0
    %580 = vmatprep.subr.mxu0 0.0
    %581 = vmatpush1.msra.mxu0 0.0
    %582 = vmatprep.subr.mxu0 0.0
    %583 = vmatpush1.msra.mxu0 0.0
    %584 = vmatprep.subr.mxu0 0.0
    %585 = vmatpush1.msra.mxu0 0.0
    %586 = vmatprep.subr.mxu0 0.0
    %587 = vmatpush1.msra.mxu0 0.0
    %588 = vmatprep.subr.mxu0 0.0
    %589 = vmatpush1.msra.mxu0 0.0
    %590 = vmatprep.subr.mxu0 0.0
    %591 = vmatpush1.msra.mxu0 0.0
    %592 = vmatprep.subr.mxu0 0.0
    %593 = vmatpush1.msra.mxu0 0.0
    %594 = vmatprep.subr.mxu0 0.0
    %595 = vmatpush1.msra.mxu0 %v557
    %596 = vmatprep.subr.mxu0 0.0
    %597 = vmatpush1.msra.mxu0 %v556
    %598 = vmatprep.subr.mxu0 0.0
    %599 = vmatpush1.msra.mxu0 %v555
    %600 = vmatprep.subr.mxu0 0.0
    %601 = vmatpush1.msra.mxu0 %v554
    %602 = vmatprep.subr.mxu0 0.0
    %603 = vmatpush2.msra.mxu0 0.0
    %604 = vmatprep.subr.mxu0 0.0
    %605 = vmatpush2.msra.mxu0 0.0
    %606 = vmatprep.subr.mxu0 0.0
    %607 = vmatpush2.msra.mxu0 0.0
    %608 = vmatprep.subr.mxu0 0.0
    %609 = vmatpush2.msra.mxu0 0.0
    %610 = vmatprep.subr.mxu0 0.0
    %611 = vmatpush2.msra.mxu0 0.0
    %612 = vmatprep.subr.mxu0 0.0
    %613 = vmatpush2.msra.mxu0 0.0
    %614 = vmatprep.subr.mxu0 0.0
    %615 = vmatpush2.msra.mxu0 0.0
    %616 = vmatprep.subr.mxu0 0.0
    %617 = vmatpush2.msra.mxu0 0.0
    %618 = vmatprep.subr.mxu0 0.0
    %619 = vmatpush2.msra.mxu0 0.0
    %620 = vmatprep.subr.mxu0 0.0
    %621 = vmatpush2.msra.mxu0 0.0
    %622 = vmatprep.subr.mxu0 0.0
    %623 = vmatpush2.msra.mxu0 0.0
    %624 = vmatprep.subr.mxu0 0.0
    %625 = vmatpush2.msra.mxu0 0.0
    %626 = vmatprep.subr.mxu0 0.0
    %627 = vmatpush2.msra.mxu0 0.0
    %628 = vmatprep.subr.mxu0 0.0
    %629 = vmatpush2.msra.mxu0 0.0
    %630 = vmatprep.subr.mxu0 0.0
    %631 = vmatpush2.msra.mxu0 0.0
    %632 = vmatprep.subr.mxu0 0.0
    %633 = vmatpush2.msra.mxu0 0.0
    %634 = vmatprep.mubr.f32.mxu0 0.0
    %635 = vmatmul.mubr.f32.gmra.mxu0 %v559
    %v636 = vpop.f32.mrf.mxu0
    %v637 = vadd.f32 0.0, %v636
    %v638 = vpop.f32.mrf.mxu0
    %639 = vmatprep.mubr.f32.mxu0 0.0
    %640 = vmatmul.mubr.f32.gmra.mxu0 %v562
    %v641 = vpop.f32.mrf.mxu0
    %v642 = vadd.f32 0.0, %v641
    %v643 = vpop.f32.mrf.mxu0
    %644 = vmatprep.mubr.f32.mxu0 0.0
    %645 = vmatmul.mubr.f32.gmra.mxu0 %v565
    %v646 = vpop.f32.mrf.mxu0
    %v647 = vadd.f32 0.0, %v646
    %v648 = vpop.f32.mrf.mxu0
    %649 = vmatprep.mubr.f32.mxu0 0.0
    %650 = vmatmul.mubr.f32.gmra.mxu0 %v568
    %v651 = vpop.f32.mrf.mxu0
    %v652 = vadd.f32 0.0, %v651
    %v653 = vpop.f32.mrf.mxu0
    %654 = vdwg.mxu0
    %v656 = vsel %vm78, %v421, 0
    %v659 = vsel %vm78, %v422, 0
    %661 = vmatprep.subr.mxu0 0.0
    %662 = vmatpush1.msra.mxu0 0.0
    %663 = vmatprep.subr.mxu0 0.0
    %664 = vmatpush1.msra.mxu0 0.0
    %665 = vmatprep.subr.mxu0 0.0
    %666 = vmatpush1.msra.mxu0 0.0
    %667 = vmatprep.subr.mxu0 0.0
    %668 = vmatpush1.msra.mxu0 0.0
    %669 = vmatprep.subr.mxu0 0.0
    %670 = vmatpush1.msra.mxu0 0.0
    %671 = vmatprep.subr.mxu0 0.0
    %672 = vmatpush1.msra.mxu0 0.0
    %673 = vmatprep.subr.mxu0 0.0
    %674 = vmatpush1.msra.mxu0 0.0
    %675 = vmatprep.subr.mxu0 0.0
    %676 = vmatpush1.msra.mxu0 0.0
    %677 = vmatprep.subr.mxu0 0.0
    %678 = vmatpush1.msra.mxu0 0.0
    %679 = vmatprep.subr.mxu0 0.0
    %680 = vmatpush1.msra.mxu0 0.0
    %681 = vmatprep.subr.mxu0 0.0
    %682 = vmatpush1.msra.mxu0 0.0
    %683 = vmatprep.subr.mxu0 0.0
    %684 = vmatpush1.msra.mxu0 0.0
    %685 = vmatprep.subr.mxu0 0.0
    %686 = vmatpush1.msra.mxu0 %v652
    %687 = vmatprep.subr.mxu0 0.0
    %688 = vmatpush1.msra.mxu0 %v647
    %689 = vmatprep.subr.mxu0 0.0
    %690 = vmatpush1.msra.mxu0 %v642
    %691 = vmatprep.subr.mxu0 0.0
    %692 = vmatpush1.msra.mxu0 %v637
    %693 = vmatprep.subr.mxu0 0.0
    %694 = vmatpush2.msra.mxu0 0.0
    %695 = vmatprep.subr.mxu0 0.0
    %696 = vmatpush2.msra.mxu0 0.0
    %697 = vmatprep.subr.mxu0 0.0
    %698 = vmatpush2.msra.mxu0 0.0
    %699 = vmatprep.subr.mxu0 0.0
    %700 = vmatpush2.msra.mxu0 0.0
    %701 = vmatprep.subr.mxu0 0.0
    %702 = vmatpush2.msra.mxu0 0.0
    %703 = vmatprep.subr.mxu0 0.0
    %704 = vmatpush2.msra.mxu0 0.0
    %705 = vmatprep.subr.mxu0 0.0
    %706 = vmatpush2.msra.mxu0 0.0
    %707 = vmatprep.subr.mxu0 0.0
    %708 = vmatpush2.msra.mxu0 0.0
    %709 = vmatprep.subr.mxu0 0.0
    %710 = vmatpush2.msra.mxu0 0.0
    %711 = vmatprep.subr.mxu0 0.0
    %712 = vmatpush2.msra.mxu0 0.0
    %713 = vmatprep.subr.mxu0 0.0
    %714 = vmatpush2.msra.mxu0 0.0
    %715 = vmatprep.subr.mxu0 0.0
    %716 = vmatpush2.msra.mxu0 0.0
    %717 = vmatprep.subr.mxu0 0.0
    %718 = vmatpush2.msra.mxu0 0.0
    %719 = vmatprep.subr.mxu0 0.0
    %720 = vmatpush2.msra.mxu0 0.0
    %721 = vmatprep.subr.mxu0 0.0
    %722 = vmatpush2.msra.mxu0 0.0
    %723 = vmatprep.subr.mxu0 0.0
    %724 = vmatpush2.msra.mxu0 0.0
    %725 = vmatprep.mubr.f32.mxu0 0.0
    %726 = vmatmul.mubr.f32.gmra.mxu0 %v656
    %v727 = vpop.f32.mrf.mxu0
    %v728 = vadd.f32 0.0, %v727
    %v729 = vpop.f32.mrf.mxu0
    %730 = vmatprep.mubr.f32.mxu0 0.0
    %731 = vmatmul.mubr.f32.gmra.mxu0 %v659
    %v732 = vpop.f32.mrf.mxu0
    %v733 = vadd.f32 0.0, %v732
    %v734 = vpop.f32.mrf.mxu0
    %735 = vdwg.mxu0
    %v736 = vld [vmem:[#allocation5] sm:$0xff]
    %v737 = vld [vmem:[#allocation5 + $0x8] sm:$0xff]
    %v738 = vmul.f32 %v728, 0.2
    %v739 = vmul.f32 %v733, 0.2
    %v740 = vmax.f32 %v738, 0.0
    %v741 = vmax.f32 %v739, 0.0
    %v742 = vsub.f32 %v736, %v740
    %v743 = vsub.f32 %v737, %v741
    %744 = vst.msk [vmem:[#allocation13] sm:$0xff] %vm78, %v742
    %745 = vst.msk [vmem:[#allocation13 + $0x8] sm:$0xff] %vm78, %v743
    %v746 = vld [vmem:[#allocation2] sm:$0xff]
    %v747 = vld [vmem:[#allocation2 + $0x8] sm:$0xff]
    %748 = vst.msk [vmem:[#allocation14] sm:$0xff] %vm78, %v746
    %749 = vst.msk [vmem:[#allocation14 + $0x8] sm:$0xff] %vm78, %v747
    %v750 = vld [vmem:[#allocation13] sm:$0xff]
    %v751 = vld [vmem:[#allocation13 + $0x8] sm:$0xff]
    %752 = vst.msk [vmem:[#allocation3] sm:$0xff] %vm78, %v750
    %753 = vst.msk [vmem:[#allocation3 + $0x8] sm:$0xff] %vm78, %v751
    %v754 = vld [vmem:[#allocation14] sm:$0xff]
    %v755 = vld [vmem:[#allocation14 + $0x8] sm:$0xff]
    %756 = vst.msk [vmem:[#allocation4] sm:$0xff] %vm78, %v754
    %757 = vst.msk [vmem:[#allocation4 + $0x8] sm:$0xff] %vm78, %v755
    %v758 = vld [vmem:[#allocation3] sm:$0xff]
    %v759 = vld [vmem:[#allocation3] sm:$0xff]
    %v760 = vld [vmem:[#allocation3 + $0x8] sm:$0xff]
    %v762 = vsel %vm78, %v758, 0
    %v765 = vsel %vm78, %v759, 0
    %v768 = vsel %vm78, %v760, 0
    %770 = vmatprep.subr.mxu0 0.0
    %771 = vmatpush1.xpose.msra.mxu0 0.0
    %772 = vmatprep.subr.mxu0 0.0
    %773 = vmatpush1.xpose.msra.mxu0 0.0
    %774 = vmatprep.subr.mxu0 0.0
    %775 = vmatpush1.xpose.msra.mxu0 0.0
    %776 = vmatprep.subr.mxu0 0.0
    %777 = vmatpush1.xpose.msra.mxu0 0.0
    %778 = vmatprep.subr.mxu0 0.0
    %779 = vmatpush1.xpose.msra.mxu0 0.0
    %780 = vmatprep.subr.mxu0 0.0
    %781 = vmatpush1.xpose.msra.mxu0 0.0
    %782 = vmatprep.subr.mxu0 0.0
    %783 = vmatpush1.xpose.msra.mxu0 0.0
    %784 = vmatprep.subr.mxu0 0.0
    %785 = vmatpush1.xpose.msra.mxu0 0.0
    %786 = vmatprep.subr.mxu0 0.0
    %787 = vmatpush1.xpose.msra.mxu0 0.0
    %788 = vmatprep.subr.mxu0 0.0
    %789 = vmatpush1.xpose.msra.mxu0 0.0
    %790 = vmatprep.subr.mxu0 0.0
    %791 = vmatpush1.xpose.msra.mxu0 0.0
    %792 = vmatprep.subr.mxu0 0.0
    %793 = vmatpush1.xpose.msra.mxu0 0.0
    %794 = vmatprep.subr.mxu0 0.0
    %795 = vmatpush1.xpose.msra.mxu0 0.0
    %796 = vmatprep.subr.mxu0 0.0
    %797 = vmatpush1.xpose.msra.mxu0 0.0
    %798 = vmatprep.subr.mxu0 0.0
    %799 = vmatpush1.xpose.msra.mxu0 %v768
    %800 = vmatprep.subr.mxu0 0.0
    %801 = vmatpush1.xpose.msra.mxu0 %v765
    %802 = vmatprep.subr.mxu0 0.0
    %803 = vmatpush2.xpose.msra.mxu0 0.0
    %804 = vmatprep.subr.mxu0 0.0
    %805 = vmatpush2.xpose.msra.mxu0 0.0
    %806 = vmatprep.subr.mxu0 0.0
    %807 = vmatpush2.xpose.msra.mxu0 0.0
    %808 = vmatprep.subr.mxu0 0.0
    %809 = vmatpush2.xpose.msra.mxu0 0.0
    %810 = vmatprep.subr.mxu0 0.0
    %811 = vmatpush2.xpose.msra.mxu0 0.0
    %812 = vmatprep.subr.mxu0 0.0
    %813 = vmatpush2.xpose.msra.mxu0 0.0
    %814 = vmatprep.subr.mxu0 0.0
    %815 = vmatpush2.xpose.msra.mxu0 0.0
    %816 = vmatprep.subr.mxu0 0.0
    %817 = vmatpush2.xpose.msra.mxu0 0.0
    %818 = vmatprep.subr.mxu0 0.0
    %819 = vmatpush2.xpose.msra.mxu0 0.0
    %820 = vmatprep.subr.mxu0 0.0
    %821 = vmatpush2.xpose.msra.mxu0 0.0
    %822 = vmatprep.subr.mxu0 0.0
    %823 = vmatpush2.xpose.msra.mxu0 0.0
    %824 = vmatprep.subr.mxu0 0.0
    %825 = vmatpush2.xpose.msra.mxu0 0.0
    %826 = vmatprep.subr.mxu0 0.0
    %827 = vmatpush2.xpose.msra.mxu0 0.0
    %828 = vmatprep.subr.mxu0 0.0
    %829 = vmatpush2.xpose.msra.mxu0 0.0
    %830 = vmatprep.subr.mxu0 0.0
    %831 = vmatpush2.xpose.msra.mxu0 0.0
    %832 = vmatprep.subr.mxu0 0.0
    %833 = vmatpush2.xpose.msra.mxu0 0.0
    %834 = vmatprep.mubr.f32.mxu0 0.0
    %835 = vmatmul.mubr.f32.gmra.mxu0 %v762
    %v836 = vpop.f32.mrf.mxu0
    %v837 = vadd.f32 0.0, %v836
    %v838 = vpop.f32.mrf.mxu0
    %839 = vdwg.mxu0
    %v840 = vmul.f32 %v837, -0.1388889
    %v841 = vmax.f32 %v840, 0.0
    %v842 = vld [vmem:[#allocation10] sm:$0xff]
    %v843 = vadd.f32 %v841, %v842
    %v844 = vld [vmem:[#allocation4] sm:$0xff]
    %v845 = vld [vmem:[#allocation4 + $0x8] sm:$0xff]
    %v847 = vsel %vm181, %v843, 0
    %849 = vmatprep.subr.mxu0 0.0
    %850 = vmatpush1.msra.mxu0 0.0
    %851 = vmatprep.subr.mxu0 0.0
    %852 = vmatpush1.msra.mxu0 0.0
    %853 = vmatprep.subr.mxu0 0.0
    %854 = vmatpush1.msra.mxu0 0.0
    %855 = vmatprep.subr.mxu0 0.0
    %856 = vmatpush1.msra.mxu0 0.0
    %857 = vmatprep.subr.mxu0 0.0
    %858 = vmatpush1.msra.mxu0 0.0
    %859 = vmatprep.subr.mxu0 0.0
    %860 = vmatpush1.msra.mxu0 0.0
    %861 = vmatprep.subr.mxu0 0.0
    %862 = vmatpush1.msra.mxu0 0.0
    %863 = vmatprep.subr.mxu0 0.0
    %864 = vmatpush1.msra.mxu0 0.0
    %865 = vmatprep.subr.mxu0 0.0
    %866 = vmatpush1.msra.mxu0 0.0
    %867 = vmatprep.subr.mxu0 0.0
    %868 = vmatpush1.msra.mxu0 0.0
    %869 = vmatprep.subr.mxu0 0.0
    %870 = vmatpush1.msra.mxu0 0.0
    %871 = vmatprep.subr.mxu0 0.0
    %872 = vmatpush1.msra.mxu0 0.0
    %873 = vmatprep.subr.mxu0 0.0
    %874 = vmatpush1.msra.mxu0 0.0
    %875 = vmatprep.subr.mxu0 0.0
    %876 = vmatpush1.msra.mxu0 0.0
    %877 = vmatprep.subr.mxu0 0.0
    %878 = vmatpush1.msra.mxu0 %v845
    %879 = vmatprep.subr.mxu0 0.0
    %880 = vmatpush1.msra.mxu0 %v844
    %881 = vmatprep.subr.mxu0 0.0
    %882 = vmatpush2.msra.mxu0 0.0
    %883 = vmatprep.subr.mxu0 0.0
    %884 = vmatpush2.msra.mxu0 0.0
    %885 = vmatprep.subr.mxu0 0.0
    %886 = vmatpush2.msra.mxu0 0.0
    %887 = vmatprep.subr.mxu0 0.0
    %888 = vmatpush2.msra.mxu0 0.0
    %889 = vmatprep.subr.mxu0 0.0
    %890 = vmatpush2.msra.mxu0 0.0
    %891 = vmatprep.subr.mxu0 0.0
    %892 = vmatpush2.msra.mxu0 0.0
    %893 = vmatprep.subr.mxu0 0.0
    %894 = vmatpush2.msra.mxu0 0.0
    %895 = vmatprep.subr.mxu0 0.0
    %896 = vmatpush2.msra.mxu0 0.0
    %897 = vmatprep.subr.mxu0 0.0
    %898 = vmatpush2.msra.mxu0 0.0
    %899 = vmatprep.subr.mxu0 0.0
    %900 = vmatpush2.msra.mxu0 0.0
    %901 = vmatprep.subr.mxu0 0.0
    %902 = vmatpush2.msra.mxu0 0.0
    %903 = vmatprep.subr.mxu0 0.0
    %904 = vmatpush2.msra.mxu0 0.0
    %905 = vmatprep.subr.mxu0 0.0
    %906 = vmatpush2.msra.mxu0 0.0
    %907 = vmatprep.subr.mxu0 0.0
    %908 = vmatpush2.msra.mxu0 0.0
    %909 = vmatprep.subr.mxu0 0.0
    %910 = vmatpush2.msra.mxu0 0.0
    %911 = vmatprep.subr.mxu0 0.0
    %912 = vmatpush2.msra.mxu0 0.0
    %913 = vmatprep.mubr.f32.mxu0 0.0
    %914 = vmatmul.mubr.f32.gmra.mxu0 %v847
    %v915 = vpop.f32.mrf.mxu0
    %v916 = vadd.f32 0.0, %v915
    %v917 = vpop.f32.mrf.mxu0
    %918 = vdwg.mxu0
    %919 = vst.msk [vmem:[#allocation2] sm:$0xff] %vm78, %v916
    %v920 = vld [vmem:[%s256] sm:$0xff]
    %v921 = vld [vmem:[#allocation3] sm:$0xff]
    %v922 = vld [vmem:[#allocation3 + $0x8] sm:$0xff]
    %v924 = vsel %vm78, %v920, 0
    %v927 = vsel %vm78, %v921, 0
    %v930 = vsel %vm78, %v922, 0
    %932 = vmatprep.subr.mxu0 0.0
    %933 = vmatpush1.xpose.msra.mxu0 0.0
    %934 = vmatprep.subr.mxu0 0.0
    %935 = vmatpush1.xpose.msra.mxu0 0.0
    %936 = vmatprep.subr.mxu0 0.0
    %937 = vmatpush1.xpose.msra.mxu0 0.0
    %938 = vmatprep.subr.mxu0 0.0
    %939 = vmatpush1.xpose.msra.mxu0 0.0
    %940 = vmatprep.subr.mxu0 0.0
    %941 = vmatpush1.xpose.msra.mxu0 0.0
    %942 = vmatprep.subr.mxu0 0.0
    %943 = vmatpush1.xpose.msra.mxu0 0.0
    %944 = vmatprep.subr.mxu0 0.0
    %945 = vmatpush1.xpose.msra.mxu0 0.0
    %946 = vmatprep.subr.mxu0 0.0
    %947 = vmatpush1.xpose.msra.mxu0 0.0
    %948 = vmatprep.subr.mxu0 0.0
    %949 = vmatpush1.xpose.msra.mxu0 0.0
    %950 = vmatprep.subr.mxu0 0.0
    %951 = vmatpush1.xpose.msra.mxu0 0.0
    %952 = vmatprep.subr.mxu0 0.0
    %953 = vmatpush1.xpose.msra.mxu0 0.0
    %954 = vmatprep.subr.mxu0 0.0
    %955 = vmatpush1.xpose.msra.mxu0 0.0
    %956 = vmatprep.subr.mxu0 0.0
    %957 = vmatpush1.xpose.msra.mxu0 0.0
    %958 = vmatprep.subr.mxu0 0.0
    %959 = vmatpush1.xpose.msra.mxu0 0.0
    %960 = vmatprep.subr.mxu0 0.0
    %961 = vmatpush1.xpose.msra.mxu0 %v930
    %962 = vmatprep.subr.mxu0 0.0
    %963 = vmatpush1.xpose.msra.mxu0 %v927
    %964 = vmatprep.subr.mxu0 0.0
    %965 = vmatpush2.xpose.msra.mxu0 0.0
    %966 = vmatprep.subr.mxu0 0.0
    %967 = vmatpush2.xpose.msra.mxu0 0.0
    %968 = vmatprep.subr.mxu0 0.0
    %969 = vmatpush2.xpose.msra.mxu0 0.0
    %970 = vmatprep.subr.mxu0 0.0
    %971 = vmatpush2.xpose.msra.mxu0 0.0
    %972 = vmatprep.subr.mxu0 0.0
    %973 = vmatpush2.xpose.msra.mxu0 0.0
    %974 = vmatprep.subr.mxu0 0.0
    %975 = vmatpush2.xpose.msra.mxu0 0.0
    %976 = vmatprep.subr.mxu0 0.0
    %977 = vmatpush2.xpose.msra.mxu0 0.0
    %978 = vmatprep.subr.mxu0 0.0
    %979 = vmatpush2.xpose.msra.mxu0 0.0
    %980 = vmatprep.subr.mxu0 0.0
    %981 = vmatpush2.xpose.msra.mxu0 0.0
    %982 = vmatprep.subr.mxu0 0.0
    %983 = vmatpush2.xpose.msra.mxu0 0.0
    %984 = vmatprep.subr.mxu0 0.0
    %985 = vmatpush2.xpose.msra.mxu0 0.0
    %986 = vmatprep.subr.mxu0 0.0
    %987 = vmatpush2.xpose.msra.mxu0 0.0
    %988 = vmatprep.subr.mxu0 0.0
    %989 = vmatpush2.xpose.msra.mxu0 0.0
    %990 = vmatprep.subr.mxu0 0.0
    %991 = vmatpush2.xpose.msra.mxu0 0.0
    %992 = vmatprep.subr.mxu0 0.0
    %993 = vmatpush2.xpose.msra.mxu0 0.0
    %994 = vmatprep.subr.mxu0 0.0
    %995 = vmatpush2.xpose.msra.mxu0 0.0
    %996 = vmatprep.mubr.f32.mxu0 0.0
    %997 = vmatmul.mubr.f32.gmra.mxu0 %v924
    %v998 = vpop.f32.mrf.mxu0
    %v999 = vadd.f32 0.0, %v998
    %v1000 = vpop.f32.mrf.mxu0
    %1001 = vdwg.mxu0
    %v1002 = vmul.f32 %v999, -0.1388889
    %v1003 = vmax.f32 %v1002, 0.0
    %v1004 = vld [vmem:[%s341] sm:$0xff]
    %v1005 = vadd.f32 %v1003, %v1004
    %v1006 = vld [vmem:[#allocation4] sm:$0xff]
    %v1007 = vld [vmem:[#allocation4 + $0x8] sm:$0xff]
    %v1009 = vsel %vm181, %v1005, 0
    %1011 = vmatprep.subr.mxu0 0.0
    %1012 = vmatpush1.msra.mxu0 0.0
    %1013 = vmatprep.subr.mxu0 0.0
    %1014 = vmatpush1.msra.mxu0 0.0
    %1015 = vmatprep.subr.mxu0 0.0
    %1016 = vmatpush1.msra.mxu0 0.0
    %1017 = vmatprep.subr.mxu0 0.0
    %1018 = vmatpush1.msra.mxu0 0.0
    %1019 = vmatprep.subr.mxu0 0.0
    %1020 = vmatpush1.msra.mxu0 0.0
    %1021 = vmatprep.subr.mxu0 0.0
    %1022 = vmatpush1.msra.mxu0 0.0
    %1023 = vmatprep.subr.mxu0 0.0
    %1024 = vmatpush1.msra.mxu0 0.0
    %1025 = vmatprep.subr.mxu0 0.0
    %1026 = vmatpush1.msra.mxu0 0.0
    %1027 = vmatprep.subr.mxu0 0.0
    %1028 = vmatpush1.msra.mxu0 0.0
    %1029 = vmatprep.subr.mxu0 0.0
    %1030 = vmatpush1.msra.mxu0 0.0
    %1031 = vmatprep.subr.mxu0 0.0
    %1032 = vmatpush1.msra.mxu0 0.0
    %1033 = vmatprep.subr.mxu0 0.0
    %1034 = vmatpush1.msra.mxu0 0.0
    %1035 = vmatprep.subr.mxu0 0.0
    %1036 = vmatpush1.msra.mxu0 0.0
    %1037 = vmatprep.subr.mxu0 0.0
    %1038 = vmatpush1.msra.mxu0 0.0
    %1039 = vmatprep.subr.mxu0 0.0
    %1040 = vmatpush1.msra.mxu0 %v1007
    %1041 = vmatprep.subr.mxu0 0.0
    %1042 = vmatpush1.msra.mxu0 %v1006
    %1043 = vmatprep.subr.mxu0 0.0
    %1044 = vmatpush2.msra.mxu0 0.0
    %1045 = vmatprep.subr.mxu0 0.0
    %1046 = vmatpush2.msra.mxu0 0.0
    %1047 = vmatprep.subr.mxu0 0.0
    %1048 = vmatpush2.msra.mxu0 0.0
    %1049 = vmatprep.subr.mxu0 0.0
    %1050 = vmatpush2.msra.mxu0 0.0
    %1051 = vmatprep.subr.mxu0 0.0
    %1052 = vmatpush2.msra.mxu0 0.0
    %1053 = vmatprep.subr.mxu0 0.0
    %1054 = vmatpush2.msra.mxu0 0.0
    %1055 = vmatprep.subr.mxu0 0.0
    %1056 = vmatpush2.msra.mxu0 0.0
    %1057 = vmatprep.subr.mxu0 0.0
    %1058 = vmatpush2.msra.mxu0 0.0
    %1059 = vmatprep.subr.mxu0 0.0
    %1060 = vmatpush2.msra.mxu0 0.0
    %1061 = vmatprep.subr.mxu0 0.0
    %1062 = vmatpush2.msra.mxu0 0.0
    %1063 = vmatprep.subr.mxu0 0.0
    %1064 = vmatpush2.msra.mxu0 0.0
    %1065 = vmatprep.subr.mxu0 0.0
    %1066 = vmatpush2.msra.mxu0 0.0
    %1067 = vmatprep.subr.mxu0 0.0
    %1068 = vmatpush2.msra.mxu0 0.0
    %1069 = vmatprep.subr.mxu0 0.0
    %1070 = vmatpush2.msra.mxu0 0.0
    %1071 = vmatprep.subr.mxu0 0.0
    %1072 = vmatpush2.msra.mxu0 0.0
    %1073 = vmatprep.subr.mxu0 0.0
    %1074 = vmatpush2.msra.mxu0 0.0
    %1075 = vmatprep.mubr.f32.mxu0 0.0
    %1076 = vmatmul.mubr.f32.gmra.mxu0 %v1009
    %v1077 = vpop.f32.mrf.mxu0
    %v1078 = vadd.f32 0.0, %v1077
    %v1079 = vpop.f32.mrf.mxu0
    %1080 = vdwg.mxu0
    %1081 = vst.msk [vmem:[%s419] sm:$0xff] %vm78, %v1078
    %v1082 = vld [vmem:[#allocation4] sm:$0xff]
    %v1083 = vld [vmem:[#allocation4 + $0x8] sm:$0xff]
    %v1084 = vld [vmem:[#allocation3] sm:$0xff]
    %v1085 = vld [vmem:[#allocation3 + $0x8] sm:$0xff]
    %1086 = vxpose.xlu0.b32.start [1/16] %v1082, 128
    %1087 = vxpose.xlu0.b32.cont [2/16] %v1083, 128
    %1088 = vxpose.xlu0.b32.cont [3/16] 0.0, 128
    %1089 = vxpose.xlu0.b32.cont [4/16] 0.0, 128
    %1090 = vxpose.xlu0.b32.cont [5/16] 0.0, 128
    %1091 = vxpose.xlu0.b32.cont [6/16] 0.0, 128
    %1092 = vxpose.xlu0.b32.cont [7/16] 0.0, 128
    %1093 = vxpose.xlu0.b32.cont [8/16] 0.0, 128
    %1094 = vxpose.xlu0.b32.cont [9/16] 0.0, 128
    %1095 = vxpose.xlu0.b32.cont [10/16] 0.0, 128
    %1096 = vxpose.xlu0.b32.cont [11/16] 0.0, 128
    %1097 = vxpose.xlu0.b32.cont [12/16] 0.0, 128
    %1098 = vxpose.xlu0.b32.cont [13/16] 0.0, 128
    %1099 = vxpose.xlu0.b32.cont [14/16] 0.0, 128
    %1100 = vxpose.xlu0.b32.cont [15/16] 0.0, 128
    %1101 = vxpose.xlu0.b32.end [16/16] 0.0, 128
    %v1102 = vpop.trf.xlu0
    %v1103 = vpop.trf.xlu0
    %v1104 = vpop.trf.xlu0
    %v1105 = vpop.trf.xlu0
    %v1106 = vpop.trf.xlu0
    %v1107 = vpop.trf.xlu0
    %v1108 = vpop.trf.xlu0
    %v1109 = vpop.trf.xlu0
    %v1110 = vpop.trf.xlu0
    %v1111 = vpop.trf.xlu0
    %v1112 = vpop.trf.xlu0
    %v1113 = vpop.trf.xlu0
    %v1114 = vpop.trf.xlu0
    %v1115 = vpop.trf.xlu0
    %v1116 = vpop.trf.xlu0
    %v1117 = vpop.trf.xlu0
    %v1119 = vsel %vm181, %v1102, 0
    %v1122 = vsel %vm181, %v1103, 0
    %v1125 = vsel %vm181, %v1104, 0
    %v1128 = vsel %vm181, %v1105, 0
    %1130 = vmatprep.subr.mxu0 0.0
    %1131 = vmatpush1.msra.mxu0 0.0
    %1132 = vmatprep.subr.mxu0 0.0
    %1133 = vmatpush1.msra.mxu0 0.0
    %1134 = vmatprep.subr.mxu0 0.0
    %1135 = vmatpush1.msra.mxu0 0.0
    %1136 = vmatprep.subr.mxu0 0.0
    %1137 = vmatpush1.msra.mxu0 0.0
    %1138 = vmatprep.subr.mxu0 0.0
    %1139 = vmatpush1.msra.mxu0 0.0
    %1140 = vmatprep.subr.mxu0 0.0
    %1141 = vmatpush1.msra.mxu0 0.0
    %1142 = vmatprep.subr.mxu0 0.0
    %1143 = vmatpush1.msra.mxu0 0.0
    %1144 = vmatprep.subr.mxu0 0.0
    %1145 = vmatpush1.msra.mxu0 0.0
    %1146 = vmatprep.subr.mxu0 0.0
    %1147 = vmatpush1.msra.mxu0 0.0
    %1148 = vmatprep.subr.mxu0 0.0
    %1149 = vmatpush1.msra.mxu0 0.0
    %1150 = vmatprep.subr.mxu0 0.0
    %1151 = vmatpush1.msra.mxu0 0.0
    %1152 = vmatprep.subr.mxu0 0.0
    %1153 = vmatpush1.msra.mxu0 0.0
    %1154 = vmatprep.subr.mxu0 0.0
    %1155 = vmatpush1.msra.mxu0 0.0
    %1156 = vmatprep.subr.mxu0 0.0
    %1157 = vmatpush1.msra.mxu0 0.0
    %1158 = vmatprep.subr.mxu0 0.0
    %1159 = vmatpush1.msra.mxu0 %v1085
    %1160 = vmatprep.subr.mxu0 0.0
    %1161 = vmatpush1.msra.mxu0 %v1084
    %1162 = vmatprep.subr.mxu0 0.0
    %1163 = vmatpush2.msra.mxu0 0.0
    %1164 = vmatprep.subr.mxu0 0.0
    %1165 = vmatpush2.msra.mxu0 0.0
    %1166 = vmatprep.subr.mxu0 0.0
    %1167 = vmatpush2.msra.mxu0 0.0
    %1168 = vmatprep.subr.mxu0 0.0
    %1169 = vmatpush2.msra.mxu0 0.0
    %1170 = vmatprep.subr.mxu0 0.0
    %1171 = vmatpush2.msra.mxu0 0.0
    %1172 = vmatprep.subr.mxu0 0.0
    %1173 = vmatpush2.msra.mxu0 0.0
    %1174 = vmatprep.subr.mxu0 0.0
    %1175 = vmatpush2.msra.mxu0 0.0
    %1176 = vmatprep.subr.mxu0 0.0
    %1177 = vmatpush2.msra.mxu0 0.0
    %1178 = vmatprep.subr.mxu0 0.0
    %1179 = vmatpush2.msra.mxu0 0.0
    %1180 = vmatprep.subr.mxu0 0.0
    %1181 = vmatpush2.msra.mxu0 0.0
    %1182 = vmatprep.subr.mxu0 0.0
    %1183 = vmatpush2.msra.mxu0 0.0
    %1184 = vmatprep.subr.mxu0 0.0
    %1185 = vmatpush2.msra.mxu0 0.0
    %1186 = vmatprep.subr.mxu0 0.0
    %1187 = vmatpush2.msra.mxu0 0.0
    %1188 = vmatprep.subr.mxu0 0.0
    %1189 = vmatpush2.msra.mxu0 0.0
    %1190 = vmatprep.subr.mxu0 0.0
    %1191 = vmatpush2.msra.mxu0 0.0
    %1192 = vmatprep.subr.mxu0 0.0
    %1193 = vmatpush2.msra.mxu0 0.0
    %1194 = vmatprep.mubr.f32.mxu0 0.0
    %1195 = vmatmul.mubr.f32.gmra.mxu0 %v1119
    %v1196 = vpop.f32.mrf.mxu0
    %v1197 = vadd.f32 0.0, %v1196
    %v1198 = vpop.f32.mrf.mxu0
    %1199 = vmatprep.mubr.f32.mxu0 0.0
    %1200 = vmatmul.mubr.f32.gmra.mxu0 %v1122
    %v1201 = vpop.f32.mrf.mxu0
    %v1202 = vadd.f32 0.0, %v1201
    %v1203 = vpop.f32.mrf.mxu0
    %1204 = vmatprep.mubr.f32.mxu0 0.0
    %1205 = vmatmul.mubr.f32.gmra.mxu0 %v1125
    %v1206 = vpop.f32.mrf.mxu0
    %v1207 = vadd.f32 0.0, %v1206
    %v1208 = vpop.f32.mrf.mxu0
    %1209 = vmatprep.mubr.f32.mxu0 0.0
    %1210 = vmatmul.mubr.f32.gmra.mxu0 %v1128
    %v1211 = vpop.f32.mrf.mxu0
    %v1212 = vadd.f32 0.0, %v1211
    %v1213 = vpop.f32.mrf.mxu0
    %1214 = vdwg.mxu0
    %v1215 = vld [vmem:[#allocation11] sm:$0xff]
    %v1216 = vld [vmem:[#allocation11 + $0x8] sm:$0xff]
    %v1217 = vld [vmem:[#allocation11 + $0x10] sm:$0xff]
    %v1218 = vld [vmem:[#allocation11 + $0x18] sm:$0xff]
    %v1220 = vsel %vm78, %v1197, 0
    %v1223 = vsel %vm78, %v1202, 0
    %v1226 = vsel %vm78, %v1207, 0
    %v1229 = vsel %vm78, %v1212, 0
    %1231 = vmatprep.subr.mxu0 0.0
    %1232 = vmatpush1.msra.mxu0 0.0
    %1233 = vmatprep.subr.mxu0 0.0
    %1234 = vmatpush1.msra.mxu0 0.0
    %1235 = vmatprep.subr.mxu0 0.0
    %1236 = vmatpush1.msra.mxu0 0.0
    %1237 = vmatprep.subr.mxu0 0.0
    %1238 = vmatpush1.msra.mxu0 0.0
    %1239 = vmatprep.subr.mxu0 0.0
    %1240 = vmatpush1.msra.mxu0 0.0
    %1241 = vmatprep.subr.mxu0 0.0
    %1242 = vmatpush1.msra.mxu0 0.0
    %1243 = vmatprep.subr.mxu0 0.0
    %1244 = vmatpush1.msra.mxu0 0.0
    %1245 = vmatprep.subr.mxu0 0.0
    %1246 = vmatpush1.msra.mxu0 0.0
    %1247 = vmatprep.subr.mxu0 0.0
    %1248 = vmatpush1.msra.mxu0 0.0
    %1249 = vmatprep.subr.mxu0 0.0
    %1250 = vmatpush1.msra.mxu0 0.0
    %1251 = vmatprep.subr.mxu0 0.0
    %1252 = vmatpush1.msra.mxu0 0.0
    %1253 = vmatprep.subr.mxu0 0.0
    %1254 = vmatpush1.msra.mxu0 0.0
    %1255 = vmatprep.subr.mxu0 0.0
    %1256 = vmatpush1.msra.mxu0 %v1218
    %1257 = vmatprep.subr.mxu0 0.0
    %1258 = vmatpush1.msra.mxu0 %v1217
    %1259 = vmatprep.subr.mxu0 0.0
    %1260 = vmatpush1.msra.mxu0 %v1216
    %1261 = vmatprep.subr.mxu0 0.0
    %1262 = vmatpush1.msra.mxu0 %v1215
    %1263 = vmatprep.subr.mxu0 0.0
    %1264 = vmatpush2.msra.mxu0 0.0
    %1265 = vmatprep.subr.mxu0 0.0
    %1266 = vmatpush2.msra.mxu0 0.0
    %1267 = vmatprep.subr.mxu0 0.0
    %1268 = vmatpush2.msra.mxu0 0.0
    %1269 = vmatprep.subr.mxu0 0.0
    %1270 = vmatpush2.msra.mxu0 0.0
    %1271 = vmatprep.subr.mxu0 0.0
    %1272 = vmatpush2.msra.mxu0 0.0
    %1273 = vmatprep.subr.mxu0 0.0
    %1274 = vmatpush2.msra.mxu0 0.0
    %1275 = vmatprep.subr.mxu0 0.0
    %1276 = vmatpush2.msra.mxu0 0.0
    %1277 = vmatprep.subr.mxu0 0.0
    %1278 = vmatpush2.msra.mxu0 0.0
    %1279 = vmatprep.subr.mxu0 0.0
    %1280 = vmatpush2.msra.mxu0 0.0
    %1281 = vmatprep.subr.mxu0 0.0
    %1282 = vmatpush2.msra.mxu0 0.0
    %1283 = vmatprep.subr.mxu0 0.0
    %1284 = vmatpush2.msra.mxu0 0.0
    %1285 = vmatprep.subr.mxu0 0.0
    %1286 = vmatpush2.msra.mxu0 0.0
    %1287 = vmatprep.subr.mxu0 0.0
    %1288 = vmatpush2.msra.mxu0 0.0
    %1289 = vmatprep.subr.mxu0 0.0
    %1290 = vmatpush2.msra.mxu0 0.0
    %1291 = vmatprep.subr.mxu0 0.0
    %1292 = vmatpush2.msra.mxu0 0.0
    %1293 = vmatprep.subr.mxu0 0.0
    %1294 = vmatpush2.msra.mxu0 0.0
    %1295 = vmatprep.mubr.f32.mxu0 0.0
    %1296 = vmatmul.mubr.f32.gmra.mxu0 %v1220
    %v1297 = vpop.f32.mrf.mxu0
    %v1298 = vadd.f32 0.0, %v1297
    %v1299 = vpop.f32.mrf.mxu0
    %1300 = vmatprep.mubr.f32.mxu0 0.0
    %1301 = vmatmul.mubr.f32.gmra.mxu0 %v1223
    %v1302 = vpop.f32.mrf.mxu0
    %v1303 = vadd.f32 0.0, %v1302
    %v1304 = vpop.f32.mrf.mxu0
    %1305 = vmatprep.mubr.f32.mxu0 0.0
    %1306 = vmatmul.mubr.f32.gmra.mxu0 %v1226
    %v1307 = vpop.f32.mrf.mxu0
    %v1308 = vadd.f32 0.0, %v1307
    %v1309 = vpop.f32.mrf.mxu0
    %1310 = vmatprep.mubr.f32.mxu0 0.0
    %1311 = vmatmul.mubr.f32.gmra.mxu0 %v1229
    %v1312 = vpop.f32.mrf.mxu0
    %v1313 = vadd.f32 0.0, %v1312
    %v1314 = vpop.f32.mrf.mxu0
    %1315 = vdwg.mxu0
    %v1317 = vsel %vm78, %v1082, 0
    %v1320 = vsel %vm78, %v1083, 0
    %1322 = vmatprep.subr.mxu0 0.0
    %1323 = vmatpush1.msra.mxu0 0.0
    %1324 = vmatprep.subr.mxu0 0.0
    %1325 = vmatpush1.msra.mxu0 0.0
    %1326 = vmatprep.subr.mxu0 0.0
    %1327 = vmatpush1.msra.mxu0 0.0
    %1328 = vmatprep.subr.mxu0 0.0
    %1329 = vmatpush1.msra.mxu0 0.0
    %1330 = vmatprep.subr.mxu0 0.0
    %1331 = vmatpush1.msra.mxu0 0.0
    %1332 = vmatprep.subr.mxu0 0.0
    %1333 = vmatpush1.msra.mxu0 0.0
    %1334 = vmatprep.subr.mxu0 0.0
    %1335 = vmatpush1.msra.mxu0 0.0
    %1336 = vmatprep.subr.mxu0 0.0
    %1337 = vmatpush1.msra.mxu0 0.0
    %1338 = vmatprep.subr.mxu0 0.0
    %1339 = vmatpush1.msra.mxu0 0.0
    %1340 = vmatprep.subr.mxu0 0.0
    %1341 = vmatpush1.msra.mxu0 0.0
    %1342 = vmatprep.subr.mxu0 0.0
    %1343 = vmatpush1.msra.mxu0 0.0
    %1344 = vmatprep.subr.mxu0 0.0
    %1345 = vmatpush1.msra.mxu0 0.0
    %1346 = vmatprep.subr.mxu0 0.0
    %1347 = vmatpush1.msra.mxu0 %v1313
    %1348 = vmatprep.subr.mxu0 0.0
    %1349 = vmatpush1.msra.mxu0 %v1308
    %1350 = vmatprep.subr.mxu0 0.0
    %1351 = vmatpush1.msra.mxu0 %v1303
    %1352 = vmatprep.subr.mxu0 0.0
    %1353 = vmatpush1.msra.mxu0 %v1298
    %1354 = vmatprep.subr.mxu0 0.0
    %1355 = vmatpush2.msra.mxu0 0.0
    %1356 = vmatprep.subr.mxu0 0.0
    %1357 = vmatpush2.msra.mxu0 0.0
    %1358 = vmatprep.subr.mxu0 0.0
    %1359 = vmatpush2.msra.mxu0 0.0
    %1360 = vmatprep.subr.mxu0 0.0
    %1361 = vmatpush2.msra.mxu0 0.0
    %1362 = vmatprep.subr.mxu0 0.0
    %1363 = vmatpush2.msra.mxu0 0.0
    %1364 = vmatprep.subr.mxu0 0.0
    %1365 = vmatpush2.msra.mxu0 0.0
    %1366 = vmatprep.subr.mxu0 0.0
    %1367 = vmatpush2.msra.mxu0 0.0
    %1368 = vmatprep.subr.mxu0 0.0
    %1369 = vmatpush2.msra.mxu0 0.0
    %1370 = vmatprep.subr.mxu0 0.0
    %1371 = vmatpush2.msra.mxu0 0.0
    %1372 = vmatprep.subr.mxu0 0.0
    %1373 = vmatpush2.msra.mxu0 0.0
    %1374 = vmatprep.subr.mxu0 0.0
    %1375 = vmatpush2.msra.mxu0 0.0
    %1376 = vmatprep.subr.mxu0 0.0
    %1377 = vmatpush2.msra.mxu0 0.0
    %1378 = vmatprep.subr.mxu0 0.0
    %1379 = vmatpush2.msra.mxu0 0.0
    %1380 = vmatprep.subr.mxu0 0.0
    %1381 = vmatpush2.msra.mxu0 0.0
    %1382 = vmatprep.subr.mxu0 0.0
    %1383 = vmatpush2.msra.mxu0 0.0
    %1384 = vmatprep.subr.mxu0 0.0
    %1385 = vmatpush2.msra.mxu0 0.0
    %1386 = vmatprep.mubr.f32.mxu0 0.0
    %1387 = vmatmul.mubr.f32.gmra.mxu0 %v1317
    %v1388 = vpop.f32.mrf.mxu0
    %v1389 = vadd.f32 0.0, %v1388
    %v1390 = vpop.f32.mrf.mxu0
    %1391 = vmatprep.mubr.f32.mxu0 0.0
    %1392 = vmatmul.mubr.f32.gmra.mxu0 %v1320
    %v1393 = vpop.f32.mrf.mxu0
    %v1394 = vadd.f32 0.0, %v1393
    %v1395 = vpop.f32.mrf.mxu0
    %1396 = vdwg.mxu0
    %v1397 = vld [vmem:[#allocation5] sm:$0xff]
    %v1398 = vld [vmem:[#allocation5 + $0x8] sm:$0xff]
    %v1399 = vmul.f32 %v1389, 0.2
    %v1400 = vmul.f32 %v1394, 0.2
    %v1401 = vmax.f32 %v1399, 0.0
    %v1402 = vmax.f32 %v1400, 0.0
    %v1403 = vsub.f32 %v1397, %v1401
    %v1404 = vsub.f32 %v1398, %v1402
    %1405 = vst.msk [vmem:[#allocation13] sm:$0xff] %vm78, %v1403
    %1406 = vst.msk [vmem:[#allocation13 + $0x8] sm:$0xff] %vm78, %v1404
    %v1407 = vld [vmem:[#allocation2] sm:$0xff]
    %v1408 = vld [vmem:[#allocation2 + $0x8] sm:$0xff]
    %1409 = vst.msk [vmem:[#allocation14] sm:$0xff] %vm78, %v1407
    %1410 = vst.msk [vmem:[#allocation14 + $0x8] sm:$0xff] %vm78, %v1408
    %v1411 = vld [vmem:[#allocation13] sm:$0xff]
    %v1412 = vld [vmem:[#allocation13 + $0x8] sm:$0xff]
    %1413 = vst.msk [vmem:[#allocation3] sm:$0xff] %vm78, %v1411
    %1414 = vst.msk [vmem:[#allocation3 + $0x8] sm:$0xff] %vm78, %v1412
    %v1415 = vld [vmem:[#allocation14] sm:$0xff]
    %v1416 = vld [vmem:[#allocation14 + $0x8] sm:$0xff]
    %1417 = vst.msk [vmem:[#allocation4] sm:$0xff] %vm78, %v1415
    %1418 = vst.msk [vmem:[#allocation4 + $0x8] sm:$0xff] %vm78, %v1416
    %v1419 = vld [vmem:[#allocation3] sm:$0xff]
    %v1420 = vld [vmem:[#allocation3] sm:$0xff]
    %v1421 = vld [vmem:[#allocation3 + $0x8] sm:$0xff]
    %v1423 = vsel %vm78, %v1419, 0
    %v1426 = vsel %vm78, %v1420, 0
    %v1429 = vsel %vm78, %v1421, 0
    %1431 = vmatprep.subr.mxu0 0.0
    %1432 = vmatpush1.xpose.msra.mxu0 0.0
    %1433 = vmatprep.subr.mxu0 0.0
    %1434 = vmatpush1.xpose.msra.mxu0 0.0
    %1435 = vmatprep.subr.mxu0 0.0
    %1436 = vmatpush1.xpose.msra.mxu0 0.0
    %1437 = vmatprep.subr.mxu0 0.0
    %1438 = vmatpush1.xpose.msra.mxu0 0.0
    %1439 = vmatprep.subr.mxu0 0.0
    %1440 = vmatpush1.xpose.msra.mxu0 0.0
    %1441 = vmatprep.subr.mxu0 0.0
    %1442 = vmatpush1.xpose.msra.mxu0 0.0
    %1443 = vmatprep.subr.mxu0 0.0
    %1444 = vmatpush1.xpose.msra.mxu0 0.0
    %1445 = vmatprep.subr.mxu0 0.0
    %1446 = vmatpush1.xpose.msra.mxu0 0.0
    %1447 = vmatprep.subr.mxu0 0.0
    %1448 = vmatpush1.xpose.msra.mxu0 0.0
    %1449 = vmatprep.subr.mxu0 0.0
    %1450 = vmatpush1.xpose.msra.mxu0 0.0
    %1451 = vmatprep.subr.mxu0 0.0
    %1452 = vmatpush1.xpose.msra.mxu0 0.0
    %1453 = vmatprep.subr.mxu0 0.0
    %1454 = vmatpush1.xpose.msra.mxu0 0.0
    %1455 = vmatprep.subr.mxu0 0.0
    %1456 = vmatpush1.xpose.msra.mxu0 0.0
    %1457 = vmatprep.subr.mxu0 0.0
    %1458 = vmatpush1.xpose.msra.mxu0 0.0
    %1459 = vmatprep.subr.mxu0 0.0
    %1460 = vmatpush1.xpose.msra.mxu0 %v1429
    %1461 = vmatprep.subr.mxu0 0.0
    %1462 = vmatpush1.xpose.msra.mxu0 %v1426
    %1463 = vmatprep.subr.mxu0 0.0
    %1464 = vmatpush2.xpose.msra.mxu0 0.0
    %1465 = vmatprep.subr.mxu0 0.0
    %1466 = vmatpush2.xpose.msra.mxu0 0.0
    %1467 = vmatprep.subr.mxu0 0.0
    %1468 = vmatpush2.xpose.msra.mxu0 0.0
    %1469 = vmatprep.subr.mxu0 0.0
    %1470 = vmatpush2.xpose.msra.mxu0 0.0
    %1471 = vmatprep.subr.mxu0 0.0
    %1472 = vmatpush2.xpose.msra.mxu0 0.0
    %1473 = vmatprep.subr.mxu0 0.0
    %1474 = vmatpush2.xpose.msra.mxu0 0.0
    %1475 = vmatprep.subr.mxu0 0.0
    %1476 = vmatpush2.xpose.msra.mxu0 0.0
    %1477 = vmatprep.subr.mxu0 0.0
    %1478 = vmatpush2.xpose.msra.mxu0 0.0
    %1479 = vmatprep.subr.mxu0 0.0
    %1480 = vmatpush2.xpose.msra.mxu0 0.0
    %1481 = vmatprep.subr.mxu0 0.0
    %1482 = vmatpush2.xpose.msra.mxu0 0.0
    %1483 = vmatprep.subr.mxu0 0.0
    %1484 = vmatpush2.xpose.msra.mxu0 0.0
    %1485 = vmatprep.subr.mxu0 0.0
    %1486 = vmatpush2.xpose.msra.mxu0 0.0
    %1487 = vmatprep.subr.mxu0 0.0
    %1488 = vmatpush2.xpose.msra.mxu0 0.0
    %1489 = vmatprep.subr.mxu0 0.0
    %1490 = vmatpush2.xpose.msra.mxu0 0.0
    %1491 = vmatprep.subr.mxu0 0.0
    %1492 = vmatpush2.xpose.msra.mxu0 0.0
    %1493 = vmatprep.subr.mxu0 0.0
    %1494 = vmatpush2.xpose.msra.mxu0 0.0
    %1495 = vmatprep.mubr.f32.mxu0 0.0
    %1496 = vmatmul.mubr.f32.gmra.mxu0 %v1423
    %v1497 = vpop.f32.mrf.mxu0
    %v1498 = vadd.f32 0.0, %v1497
    %v1499 = vpop.f32.mrf.mxu0
    %1500 = vdwg.mxu0
    %v1501 = vmul.f32 %v1498, -0.1388889
    %v1502 = vmax.f32 %v1501, 0.0
    %v1503 = vld [vmem:[#allocation10] sm:$0xff]
    %v1504 = vadd.f32 %v1502, %v1503
    %v1505 = vld [vmem:[#allocation4] sm:$0xff]
    %v1506 = vld [vmem:[#allocation4 + $0x8] sm:$0xff]
    %v1508 = vsel %vm181, %v1504, 0
    %1510 = vmatprep.subr.mxu0 0.0
    %1511 = vmatpush1.msra.mxu0 0.0
    %1512 = vmatprep.subr.mxu0 0.0
    %1513 = vmatpush1.msra.mxu0 0.0
    %1514 = vmatprep.subr.mxu0 0.0
    %1515 = vmatpush1.msra.mxu0 0.0
    %1516 = vmatprep.subr.mxu0 0.0
    %1517 = vmatpush1.msra.mxu0 0.0
    %1518 = vmatprep.subr.mxu0 0.0
    %1519 = vmatpush1.msra.mxu0 0.0
    %1520 = vmatprep.subr.mxu0 0.0
    %1521 = vmatpush1.msra.mxu0 0.0
    %1522 = vmatprep.subr.mxu0 0.0
    %1523 = vmatpush1.msra.mxu0 0.0
    %1524 = vmatprep.subr.mxu0 0.0
    %1525 = vmatpush1.msra.mxu0 0.0
    %1526 = vmatprep.subr.mxu0 0.0
    %1527 = vmatpush1.msra.mxu0 0.0
    %1528 = vmatprep.subr.mxu0 0.0
    %1529 = vmatpush1.msra.mxu0 0.0
    %1530 = vmatprep.subr.mxu0 0.0
    %1531 = vmatpush1.msra.mxu0 0.0
    %1532 = vmatprep.subr.mxu0 0.0
    %1533 = vmatpush1.msra.mxu0 0.0
    %1534 = vmatprep.subr.mxu0 0.0
    %1535 = vmatpush1.msra.mxu0 0.0
    %1536 = vmatprep.subr.mxu0 0.0
    %1537 = vmatpush1.msra.mxu0 0.0
    %1538 = vmatprep.subr.mxu0 0.0
    %1539 = vmatpush1.msra.mxu0 %v1506
    %1540 = vmatprep.subr.mxu0 0.0
    %1541 = vmatpush1.msra.mxu0 %v1505
    %1542 = vmatprep.subr.mxu0 0.0
    %1543 = vmatpush2.msra.mxu0 0.0
    %1544 = vmatprep.subr.mxu0 0.0
    %1545 = vmatpush2.msra.mxu0 0.0
    %1546 = vmatprep.subr.mxu0 0.0
    %1547 = vmatpush2.msra.mxu0 0.0
    %1548 = vmatprep.subr.mxu0 0.0
    %1549 = vmatpush2.msra.mxu0 0.0
    %1550 = vmatprep.subr.mxu0 0.0
    %1551 = vmatpush2.msra.mxu0 0.0
    %1552 = vmatprep.subr.mxu0 0.0
    %1553 = vmatpush2.msra.mxu0 0.0
    %1554 = vmatprep.subr.mxu0 0.0
    %1555 = vmatpush2.msra.mxu0 0.0
    %1556 = vmatprep.subr.mxu0 0.0
    %1557 = vmatpush2.msra.mxu0 0.0
    %1558 = vmatprep.subr.mxu0 0.0
    %1559 = vmatpush2.msra.mxu0 0.0
    %1560 = vmatprep.subr.mxu0 0.0
    %1561 = vmatpush2.msra.mxu0 0.0
    %1562 = vmatprep.subr.mxu0 0.0
    %1563 = vmatpush2.msra.mxu0 0.0
    %1564 = vmatprep.subr.mxu0 0.0
    %1565 = vmatpush2.msra.mxu0 0.0
    %1566 = vmatprep.subr.mxu0 0.0
    %1567 = vmatpush2.msra.mxu0 0.0
    %1568 = vmatprep.subr.mxu0 0.0
    %1569 = vmatpush2.msra.mxu0 0.0
    %1570 = vmatprep.subr.mxu0 0.0
    %1571 = vmatpush2.msra.mxu0 0.0
    %1572 = vmatprep.subr.mxu0 0.0
    %1573 = vmatpush2.msra.mxu0 0.0
    %1574 = vmatprep.mubr.f32.mxu0 0.0
    %1575 = vmatmul.mubr.f32.gmra.mxu0 %v1508
    %v1576 = vpop.f32.mrf.mxu0
    %v1577 = vadd.f32 0.0, %v1576
    %v1578 = vpop.f32.mrf.mxu0
    %1579 = vdwg.mxu0
    %1580 = vst.msk [vmem:[#allocation2] sm:$0xff] %vm78, %v1577
    %v1581 = vld [vmem:[%s256] sm:$0xff]
    %v1582 = vld [vmem:[#allocation3] sm:$0xff]
    %v1583 = vld [vmem:[#allocation3 + $0x8] sm:$0xff]
    %v1585 = vsel %vm78, %v1581, 0
    %v1588 = vsel %vm78, %v1582, 0
    %v1591 = vsel %vm78, %v1583, 0
    %1593 = vmatprep.subr.mxu0 0.0
    %1594 = vmatpush1.xpose.msra.mxu0 0.0
    %1595 = vmatprep.subr.mxu0 0.0
    %1596 = vmatpush1.xpose.msra.mxu0 0.0
    %1597 = vmatprep.subr.mxu0 0.0
    %1598 = vmatpush1.xpose.msra.mxu0 0.0
    %1599 = vmatprep.subr.mxu0 0.0
    %1600 = vmatpush1.xpose.msra.mxu0 0.0
    %1601 = vmatprep.subr.mxu0 0.0
    %1602 = vmatpush1.xpose.msra.mxu0 0.0
    %1603 = vmatprep.subr.mxu0 0.0
    %1604 = vmatpush1.xpose.msra.mxu0 0.0
    %1605 = vmatprep.subr.mxu0 0.0
    %1606 = vmatpush1.xpose.msra.mxu0 0.0
    %1607 = vmatprep.subr.mxu0 0.0
    %1608 = vmatpush1.xpose.msra.mxu0 0.0
    %1609 = vmatprep.subr.mxu0 0.0
    %1610 = vmatpush1.xpose.msra.mxu0 0.0
    %1611 = vmatprep.subr.mxu0 0.0
    %1612 = vmatpush1.xpose.msra.mxu0 0.0
    %1613 = vmatprep.subr.mxu0 0.0
    %1614 = vmatpush1.xpose.msra.mxu0 0.0
    %1615 = vmatprep.subr.mxu0 0.0
    %1616 = vmatpush1.xpose.msra.mxu0 0.0
    %1617 = vmatprep.subr.mxu0 0.0
    %1618 = vmatpush1.xpose.msra.mxu0 0.0
    %1619 = vmatprep.subr.mxu0 0.0
    %1620 = vmatpush1.xpose.msra.mxu0 0.0
    %1621 = vmatprep.subr.mxu0 0.0
    %1622 = vmatpush1.xpose.msra.mxu0 %v1591
    %1623 = vmatprep.subr.mxu0 0.0
    %1624 = vmatpush1.xpose.msra.mxu0 %v1588
    %1625 = vmatprep.subr.mxu0 0.0
    %1626 = vmatpush2.xpose.msra.mxu0 0.0
    %1627 = vmatprep.subr.mxu0 0.0
    %1628 = vmatpush2.xpose.msra.mxu0 0.0
    %1629 = vmatprep.subr.mxu0 0.0
    %1630 = vmatpush2.xpose.msra.mxu0 0.0
    %1631 = vmatprep.subr.mxu0 0.0
    %1632 = vmatpush2.xpose.msra.mxu0 0.0
    %1633 = vmatprep.subr.mxu0 0.0
    %1634 = vmatpush2.xpose.msra.mxu0 0.0
    %1635 = vmatprep.subr.mxu0 0.0
    %1636 = vmatpush2.xpose.msra.mxu0 0.0
    %1637 = vmatprep.subr.mxu0 0.0
    %1638 = vmatpush2.xpose.msra.mxu0 0.0
    %1639 = vmatprep.subr.mxu0 0.0
    %1640 = vmatpush2.xpose.msra.mxu0 0.0
    %1641 = vmatprep.subr.mxu0 0.0
    %1642 = vmatpush2.xpose.msra.mxu0 0.0
    %1643 = vmatprep.subr.mxu0 0.0
    %1644 = vmatpush2.xpose.msra.mxu0 0.0
    %1645 = vmatprep.subr.mxu0 0.0
    %1646 = vmatpush2.xpose.msra.mxu0 0.0
    %1647 = vmatprep.subr.mxu0 0.0
    %1648 = vmatpush2.xpose.msra.mxu0 0.0
    %1649 = vmatprep.subr.mxu0 0.0
    %1650 = vmatpush2.xpose.msra.mxu0 0.0
    %1651 = vmatprep.subr.mxu0 0.0
    %1652 = vmatpush2.xpose.msra.mxu0 0.0
    %1653 = vmatprep.subr.mxu0 0.0
    %1654 = vmatpush2.xpose.msra.mxu0 0.0
    %1655 = vmatprep.subr.mxu0 0.0
    %1656 = vmatpush2.xpose.msra.mxu0 0.0
    %1657 = vmatprep.mubr.f32.mxu0 0.0
    %1658 = vmatmul.mubr.f32.gmra.mxu0 %v1585
    %v1659 = vpop.f32.mrf.mxu0
    %v1660 = vadd.f32 0.0, %v1659
    %v1661 = vpop.f32.mrf.mxu0
    %1662 = vdwg.mxu0
    %v1663 = vmul.f32 %v1660, -0.1388889
    %v1664 = vmax.f32 %v1663, 0.0
    %v1665 = vld [vmem:[%s341] sm:$0xff]
    %v1666 = vadd.f32 %v1664, %v1665
    %v1667 = vld [vmem:[#allocation4] sm:$0xff]
    %v1668 = vld [vmem:[#allocation4 + $0x8] sm:$0xff]
    %v1670 = vsel %vm181, %v1666, 0
    %1672 = vmatprep.subr.mxu0 0.0
    %1673 = vmatpush1.msra.mxu0 0.0
    %1674 = vmatprep.subr.mxu0 0.0
    %1675 = vmatpush1.msra.mxu0 0.0
    %1676 = vmatprep.subr.mxu0 0.0
    %1677 = vmatpush1.msra.mxu0 0.0
    %1678 = vmatprep.subr.mxu0 0.0
    %1679 = vmatpush1.msra.mxu0 0.0
    %1680 = vmatprep.subr.mxu0 0.0
    %1681 = vmatpush1.msra.mxu0 0.0
    %1682 = vmatprep.subr.mxu0 0.0
    %1683 = vmatpush1.msra.mxu0 0.0
    %1684 = vmatprep.subr.mxu0 0.0
    %1685 = vmatpush1.msra.mxu0 0.0
    %1686 = vmatprep.subr.mxu0 0.0
    %1687 = vmatpush1.msra.mxu0 0.0
    %1688 = vmatprep.subr.mxu0 0.0
    %1689 = vmatpush1.msra.mxu0 0.0
    %1690 = vmatprep.subr.mxu0 0.0
    %1691 = vmatpush1.msra.mxu0 0.0
    %1692 = vmatprep.subr.mxu0 0.0
    %1693 = vmatpush1.msra.mxu0 0.0
    %1694 = vmatprep.subr.mxu0 0.0
    %1695 = vmatpush1.msra.mxu0 0.0
    %1696 = vmatprep.subr.mxu0 0.0
    %1697 = vmatpush1.msra.mxu0 0.0
    %1698 = vmatprep.subr.mxu0 0.0
    %1699 = vmatpush1.msra.mxu0 0.0
    %1700 = vmatprep.subr.mxu0 0.0
    %1701 = vmatpush1.msra.mxu0 %v1668
    %1702 = vmatprep.subr.mxu0 0.0
    %1703 = vmatpush1.msra.mxu0 %v1667
    %1704 = vmatprep.subr.mxu0 0.0
    %1705 = vmatpush2.msra.mxu0 0.0
    %1706 = vmatprep.subr.mxu0 0.0
    %1707 = vmatpush2.msra.mxu0 0.0
    %1708 = vmatprep.subr.mxu0 0.0
    %1709 = vmatpush2.msra.mxu0 0.0
    %1710 = vmatprep.subr.mxu0 0.0
    %1711 = vmatpush2.msra.mxu0 0.0
    %1712 = vmatprep.subr.mxu0 0.0
    %1713 = vmatpush2.msra.mxu0 0.0
    %1714 = vmatprep.subr.mxu0 0.0
    %1715 = vmatpush2.msra.mxu0 0.0
    %1716 = vmatprep.subr.mxu0 0.0
    %1717 = vmatpush2.msra.mxu0 0.0
    %1718 = vmatprep.subr.mxu0 0.0
    %1719 = vmatpush2.msra.mxu0 0.0
    %1720 = vmatprep.subr.mxu0 0.0
    %1721 = vmatpush2.msra.mxu0 0.0
    %1722 = vmatprep.subr.mxu0 0.0
    %1723 = vmatpush2.msra.mxu0 0.0
    %1724 = vmatprep.subr.mxu0 0.0
    %1725 = vmatpush2.msra.mxu0 0.0
    %1726 = vmatprep.subr.mxu0 0.0
    %1727 = vmatpush2.msra.mxu0 0.0
    %1728 = vmatprep.subr.mxu0 0.0
    %1729 = vmatpush2.msra.mxu0 0.0
    %1730 = vmatprep.subr.mxu0 0.0
    %1731 = vmatpush2.msra.mxu0 0.0
    %1732 = vmatprep.subr.mxu0 0.0
    %1733 = vmatpush2.msra.mxu0 0.0
    %1734 = vmatprep.subr.mxu0 0.0
    %1735 = vmatpush2.msra.mxu0 0.0
    %1736 = vmatprep.mubr.f32.mxu0 0.0
    %1737 = vmatmul.mubr.f32.gmra.mxu0 %v1670
    %v1738 = vpop.f32.mrf.mxu0
    %v1739 = vadd.f32 0.0, %v1738
    %v1740 = vpop.f32.mrf.mxu0
    %1741 = vdwg.mxu0
    %1742 = vst.msk [vmem:[%s419] sm:$0xff] %vm78, %v1739
    %v1743 = vld [vmem:[#allocation4] sm:$0xff]
    %v1744 = vld [vmem:[#allocation4 + $0x8] sm:$0xff]
    %v1745 = vld [vmem:[#allocation3] sm:$0xff]
    %v1746 = vld [vmem:[#allocation3 + $0x8] sm:$0xff]
    %1747 = vxpose.xlu0.b32.start [1/16] %v1743, 128
    %1748 = vxpose.xlu0.b32.cont [2/16] %v1744, 128
    %1749 = vxpose.xlu0.b32.cont [3/16] 0.0, 128
    %1750 = vxpose.xlu0.b32.cont [4/16] 0.0, 128
    %1751 = vxpose.xlu0.b32.cont [5/16] 0.0, 128
    %1752 = vxpose.xlu0.b32.cont [6/16] 0.0, 128
    %1753 = vxpose.xlu0.b32.cont [7/16] 0.0, 128
    %1754 = vxpose.xlu0.b32.cont [8/16] 0.0, 128
    %1755 = vxpose.xlu0.b32.cont [9/16] 0.0, 128
    %1756 = vxpose.xlu0.b32.cont [10/16] 0.0, 128
    %1757 = vxpose.xlu0.b32.cont [11/16] 0.0, 128
    %1758 = vxpose.xlu0.b32.cont [12/16] 0.0, 128
    %1759 = vxpose.xlu0.b32.cont [13/16] 0.0, 128
    %1760 = vxpose.xlu0.b32.cont [14/16] 0.0, 128
    %1761 = vxpose.xlu0.b32.cont [15/16] 0.0, 128
    %1762 = vxpose.xlu0.b32.end [16/16] 0.0, 128
    %v1763 = vpop.trf.xlu0
    %v1764 = vpop.trf.xlu0
    %v1765 = vpop.trf.xlu0
    %v1766 = vpop.trf.xlu0
    %v1767 = vpop.trf.xlu0
    %v1768 = vpop.trf.xlu0
    %v1769 = vpop.trf.xlu0
    %v1770 = vpop.trf.xlu0
    %v1771 = vpop.trf.xlu0
    %v1772 = vpop.trf.xlu0
    %v1773 = vpop.trf.xlu0
    %v1774 = vpop.trf.xlu0
    %v1775 = vpop.trf.xlu0
    %v1776 = vpop.trf.xlu0
    %v1777 = vpop.trf.xlu0
    %v1778 = vpop.trf.xlu0
    %v1780 = vsel %vm181, %v1763, 0
    %v1783 = vsel %vm181, %v1764, 0
    %v1786 = vsel %vm181, %v1765, 0
    %v1789 = vsel %vm181, %v1766, 0
    %1791 = vmatprep.subr.mxu0 0.0
    %1792 = vmatpush1.msra.mxu0 0.0
    %1793 = vmatprep.subr.mxu0 0.0
    %1794 = vmatpush1.msra.mxu0 0.0
    %1795 = vmatprep.subr.mxu0 0.0
    %1796 = vmatpush1.msra.mxu0 0.0
    %1797 = vmatprep.subr.mxu0 0.0
    %1798 = vmatpush1.msra.mxu0 0.0
    %1799 = vmatprep.subr.mxu0 0.0
    %1800 = vmatpush1.msra.mxu0 0.0
    %1801 = vmatprep.subr.mxu0 0.0
    %1802 = vmatpush1.msra.mxu0 0.0
    %1803 = vmatprep.subr.mxu0 0.0
    %1804 = vmatpush1.msra.mxu0 0.0
    %1805 = vmatprep.subr.mxu0 0.0
    %1806 = vmatpush1.msra.mxu0 0.0
    %1807 = vmatprep.subr.mxu0 0.0
    %1808 = vmatpush1.msra.mxu0 0.0
    %1809 = vmatprep.subr.mxu0 0.0
    %1810 = vmatpush1.msra.mxu0 0.0
    %1811 = vmatprep.subr.mxu0 0.0
    %1812 = vmatpush1.msra.mxu0 0.0
    %1813 = vmatprep.subr.mxu0 0.0
    %1814 = vmatpush1.msra.mxu0 0.0
    %1815 = vmatprep.subr.mxu0 0.0
    %1816 = vmatpush1.msra.mxu0 0.0
    %1817 = vmatprep.subr.mxu0 0.0
    %1818 = vmatpush1.msra.mxu0 0.0
    %1819 = vmatprep.subr.mxu0 0.0
    %1820 = vmatpush1.msra.mxu0 %v1746
    %1821 = vmatprep.subr.mxu0 0.0
    %1822 = vmatpush1.msra.mxu0 %v1745
    %1823 = vmatprep.subr.mxu0 0.0
    %1824 = vmatpush2.msra.mxu0 0.0
    %1825 = vmatprep.subr.mxu0 0.0
    %1826 = vmatpush2.msra.mxu0 0.0
    %1827 = vmatprep.subr.mxu0 0.0
    %1828 = vmatpush2.msra.mxu0 0.0
    %1829 = vmatprep.subr.mxu0 0.0
    %1830 = vmatpush2.msra.mxu0 0.0
    %1831 = vmatprep.subr.mxu0 0.0
    %1832 = vmatpush2.msra.mxu0 0.0
    %1833 = vmatprep.subr.mxu0 0.0
    %1834 = vmatpush2.msra.mxu0 0.0
    %1835 = vmatprep.subr.mxu0 0.0
    %1836 = vmatpush2.msra.mxu0 0.0
    %1837 = vmatprep.subr.mxu0 0.0
    %1838 = vmatpush2.msra.mxu0 0.0
    %1839 = vmatprep.subr.mxu0 0.0
    %1840 = vmatpush2.msra.mxu0 0.0
    %1841 = vmatprep.subr.mxu0 0.0
    %1842 = vmatpush2.msra.mxu0 0.0
    %1843 = vmatprep.subr.mxu0 0.0
    %1844 = vmatpush2.msra.mxu0 0.0
    %1845 = vmatprep.subr.mxu0 0.0
    %1846 = vmatpush2.msra.mxu0 0.0
    %1847 = vmatprep.subr.mxu0 0.0
    %1848 = vmatpush2.msra.mxu0 0.0
    %1849 = vmatprep.subr.mxu0 0.0
    %1850 = vmatpush2.msra.mxu0 0.0
    %1851 = vmatprep.subr.mxu0 0.0
    %1852 = vmatpush2.msra.mxu0 0.0
    %1853 = vmatprep.subr.mxu0 0.0
    %1854 = vmatpush2.msra.mxu0 0.0
    %1855 = vmatprep.mubr.f32.mxu0 0.0
    %1856 = vmatmul.mubr.f32.gmra.mxu0 %v1780
    %v1857 = vpop.f32.mrf.mxu0
    %v1858 = vadd.f32 0.0, %v1857
    %v1859 = vpop.f32.mrf.mxu0
    %1860 = vmatprep.mubr.f32.mxu0 0.0
    %1861 = vmatmul.mubr.f32.gmra.mxu0 %v1783
    %v1862 = vpop.f32.mrf.mxu0
    %v1863 = vadd.f32 0.0, %v1862
    %v1864 = vpop.f32.mrf.mxu0
    %1865 = vmatprep.mubr.f32.mxu0 0.0
    %1866 = vmatmul.mubr.f32.gmra.mxu0 %v1786
    %v1867 = vpop.f32.mrf.mxu0
    %v1868 = vadd.f32 0.0, %v1867
    %v1869 = vpop.f32.mrf.mxu0
    %1870 = vmatprep.mubr.f32.mxu0 0.0
    %1871 = vmatmul.mubr.f32.gmra.mxu0 %v1789
    %v1872 = vpop.f32.mrf.mxu0
    %v1873 = vadd.f32 0.0, %v1872
    %v1874 = vpop.f32.mrf.mxu0
    %1875 = vdwg.mxu0
    %v1876 = vld [vmem:[#allocation11] sm:$0xff]
    %v1877 = vld [vmem:[#allocation11 + $0x8] sm:$0xff]
    %v1878 = vld [vmem:[#allocation11 + $0x10] sm:$0xff]
    %v1879 = vld [vmem:[#allocation11 + $0x18] sm:$0xff]
    %v1881 = vsel %vm78, %v1858, 0
    %v1884 = vsel %vm78, %v1863, 0
    %v1887 = vsel %vm78, %v1868, 0
    %v1890 = vsel %vm78, %v1873, 0
    %1892 = vmatprep.subr.mxu0 0.0
    %1893 = vmatpush1.msra.mxu0 0.0
    %1894 = vmatprep.subr.mxu0 0.0
    %1895 = vmatpush1.msra.mxu0 0.0
    %1896 = vmatprep.subr.mxu0 0.0
    %1897 = vmatpush1.msra.mxu0 0.0
    %1898 = vmatprep.subr.mxu0 0.0
    %1899 = vmatpush1.msra.mxu0 0.0
    %1900 = vmatprep.subr.mxu0 0.0
    %1901 = vmatpush1.msra.mxu0 0.0
    %1902 = vmatprep.subr.mxu0 0.0
    %1903 = vmatpush1.msra.mxu0 0.0
    %1904 = vmatprep.subr.mxu0 0.0
    %1905 = vmatpush1.msra.mxu0 0.0
    %1906 = vmatprep.subr.mxu0 0.0
    %1907 = vmatpush1.msra.mxu0 0.0
    %1908 = vmatprep.subr.mxu0 0.0
    %1909 = vmatpush1.msra.mxu0 0.0
    %1910 = vmatprep.subr.mxu0 0.0
    %1911 = vmatpush1.msra.mxu0 0.0
    %1912 = vmatprep.subr.mxu0 0.0
    %1913 = vmatpush1.msra.mxu0 0.0
    %1914 = vmatprep.subr.mxu0 0.0
    %1915 = vmatpush1.msra.mxu0 0.0
    %1916 = vmatprep.subr.mxu0 0.0
    %1917 = vmatpush1.msra.mxu0 %v1879
    %1918 = vmatprep.subr.mxu0 0.0
    %1919 = vmatpush1.msra.mxu0 %v1878
    %1920 = vmatprep.subr.mxu0 0.0
    %1921 = vmatpush1.msra.mxu0 %v1877
    %1922 = vmatprep.subr.mxu0 0.0
    %1923 = vmatpush1.msra.mxu0 %v1876
    %1924 = vmatprep.subr.mxu0 0.0
    %1925 = vmatpush2.msra.mxu0 0.0
    %1926 = vmatprep.subr.mxu0 0.0
    %1927 = vmatpush2.msra.mxu0 0.0
    %1928 = vmatprep.subr.mxu0 0.0
    %1929 = vmatpush2.msra.mxu0 0.0
    %1930 = vmatprep.subr.mxu0 0.0
    %1931 = vmatpush2.msra.mxu0 0.0
    %1932 = vmatprep.subr.mxu0 0.0
    %1933 = vmatpush2.msra.mxu0 0.0
    %1934 = vmatprep.subr.mxu0 0.0
    %1935 = vmatpush2.msra.mxu0 0.0
    %1936 = vmatprep.subr.mxu0 0.0
    %1937 = vmatpush2.msra.mxu0 0.0
    %1938 = vmatprep.subr.mxu0 0.0
    %1939 = vmatpush2.msra.mxu0 0.0
    %1940 = vmatprep.subr.mxu0 0.0
    %1941 = vmatpush2.msra.mxu0 0.0
    %1942 = vmatprep.subr.mxu0 0.0
    %1943 = vmatpush2.msra.mxu0 0.0
    %1944 = vmatprep.subr.mxu0 0.0
    %1945 = vmatpush2.msra.mxu0 0.0
    %1946 = vmatprep.subr.mxu0 0.0
    %1947 = vmatpush2.msra.mxu0 0.0
    %1948 = vmatprep.subr.mxu0 0.0
    %1949 = vmatpush2.msra.mxu0 0.0
    %1950 = vmatprep.subr.mxu0 0.0
    %1951 = vmatpush2.msra.mxu0 0.0
    %1952 = vmatprep.subr.mxu0 0.0
    %1953 = vmatpush2.msra.mxu0 0.0
    %1954 = vmatprep.subr.mxu0 0.0
    %1955 = vmatpush2.msra.mxu0 0.0
    %1956 = vmatprep.mubr.f32.mxu0 0.0
    %1957 = vmatmul.mubr.f32.gmra.mxu0 %v1881
    %v1958 = vpop.f32.mrf.mxu0
    %v1959 = vadd.f32 0.0, %v1958
    %v1960 = vpop.f32.mrf.mxu0
    %1961 = vmatprep.mubr.f32.mxu0 0.0
    %1962 = vmatmul.mubr.f32.gmra.mxu0 %v1884
    %v1963 = vpop.f32.mrf.mxu0
    %v1964 = vadd.f32 0.0, %v1963
    %v1965 = vpop.f32.mrf.mxu0
    %1966 = vmatprep.mubr.f32.mxu0 0.0
    %1967 = vmatmul.mubr.f32.gmra.mxu0 %v1887
    %v1968 = vpop.f32.mrf.mxu0
    %v1969 = vadd.f32 0.0, %v1968
    %v1970 = vpop.f32.mrf.mxu0
    %1971 = vmatprep.mubr.f32.mxu0 0.0
    %1972 = vmatmul.mubr.f32.gmra.mxu0 %v1890
    %v1973 = vpop.f32.mrf.mxu0
    %v1974 = vadd.f32 0.0, %v1973
    %v1975 = vpop.f32.mrf.mxu0
    %1976 = vdwg.mxu0
    %v1978 = vsel %vm78, %v1743, 0
    %v1981 = vsel %vm78, %v1744, 0
    %1983 = vmatprep.subr.mxu0 0.0
    %1984 = vmatpush1.msra.mxu0 0.0
    %1985 = vmatprep.subr.mxu0 0.0
    %1986 = vmatpush1.msra.mxu0 0.0
    %1987 = vmatprep.subr.mxu0 0.0
    %1988 = vmatpush1.msra.mxu0 0.0
    %1989 = vmatprep.subr.mxu0 0.0
    %1990 = vmatpush1.msra.mxu0 0.0
    %1991 = vmatprep.subr.mxu0 0.0
    %1992 = vmatpush1.msra.mxu0 0.0
    %1993 = vmatprep.subr.mxu0 0.0
    %1994 = vmatpush1.msra.mxu0 0.0
    %1995 = vmatprep.subr.mxu0 0.0
    %1996 = vmatpush1.msra.mxu0 0.0
    %1997 = vmatprep.subr.mxu0 0.0
    %1998 = vmatpush1.msra.mxu0 0.0
    %1999 = vmatprep.subr.mxu0 0.0
    %2000 = vmatpush1.msra.mxu0 0.0
    %2001 = vmatprep.subr.mxu0 0.0
    %2002 = vmatpush1.msra.mxu0 0.0
    %2003 = vmatprep.subr.mxu0 0.0
    %2004 = vmatpush1.msra.mxu0 0.0
    %2005 = vmatprep.subr.mxu0 0.0
    %2006 = vmatpush1.msra.mxu0 0.0
    %2007 = vmatprep.subr.mxu0 0.0
    %2008 = vmatpush1.msra.mxu0 %v1974
    %2009 = vmatprep.subr.mxu0 0.0
    %2010 = vmatpush1.msra.mxu0 %v1969
    %2011 = vmatprep.subr.mxu0 0.0
    %2012 = vmatpush1.msra.mxu0 %v1964
    %2013 = vmatprep.subr.mxu0 0.0
    %2014 = vmatpush1.msra.mxu0 %v1959
    %2015 = vmatprep.subr.mxu0 0.0
    %2016 = vmatpush2.msra.mxu0 0.0
    %2017 = vmatprep.subr.mxu0 0.0
    %2018 = vmatpush2.msra.mxu0 0.0
    %2019 = vmatprep.subr.mxu0 0.0
    %2020 = vmatpush2.msra.mxu0 0.0
    %2021 = vmatprep.subr.mxu0 0.0
    %2022 = vmatpush2.msra.mxu0 0.0
    %2023 = vmatprep.subr.mxu0 0.0
    %2024 = vmatpush2.msra.mxu0 0.0
    %2025 = vmatprep.subr.mxu0 0.0
    %2026 = vmatpush2.msra.mxu0 0.0
    %2027 = vmatprep.subr.mxu0 0.0
    %2028 = vmatpush2.msra.mxu0 0.0
    %2029 = vmatprep.subr.mxu0 0.0
    %2030 = vmatpush2.msra.mxu0 0.0
    %2031 = vmatprep.subr.mxu0 0.0
    %2032 = vmatpush2.msra.mxu0 0.0
    %2033 = vmatprep.subr.mxu0 0.0
    %2034 = vmatpush2.msra.mxu0 0.0
    %2035 = vmatprep.subr.mxu0 0.0
    %2036 = vmatpush2.msra.mxu0 0.0
    %2037 = vmatprep.subr.mxu0 0.0
    %2038 = vmatpush2.msra.mxu0 0.0
    %2039 = vmatprep.subr.mxu0 0.0
    %2040 = vmatpush2.msra.mxu0 0.0
    %2041 = vmatprep.subr.mxu0 0.0
    %2042 = vmatpush2.msra.mxu0 0.0
    %2043 = vmatprep.subr.mxu0 0.0
    %2044 = vmatpush2.msra.mxu0 0.0
    %2045 = vmatprep.subr.mxu0 0.0
    %2046 = vmatpush2.msra.mxu0 0.0
    %2047 = vmatprep.mubr.f32.mxu0 0.0
    %2048 = vmatmul.mubr.f32.gmra.mxu0 %v1978
    %v2049 = vpop.f32.mrf.mxu0
    %v2050 = vadd.f32 0.0, %v2049
    %v2051 = vpop.f32.mrf.mxu0
    %2052 = vmatprep.mubr.f32.mxu0 0.0
    %2053 = vmatmul.mubr.f32.gmra.mxu0 %v1981
    %v2054 = vpop.f32.mrf.mxu0
    %v2055 = vadd.f32 0.0, %v2054
    %v2056 = vpop.f32.mrf.mxu0
    %2057 = vdwg.mxu0
    %v2058 = vld [vmem:[#allocation5] sm:$0xff]
    %v2059 = vld [vmem:[#allocation5 + $0x8] sm:$0xff]
    %v2060 = vmul.f32 %v2050, 0.2
    %v2061 = vmul.f32 %v2055, 0.2
    %v2062 = vmax.f32 %v2060, 0.0
    %v2063 = vmax.f32 %v2061, 0.0
    %v2064 = vsub.f32 %v2058, %v2062
    %v2065 = vsub.f32 %v2059, %v2063
    %2066 = vst.msk [vmem:[#allocation13] sm:$0xff] %vm78, %v2064
    %2067 = vst.msk [vmem:[#allocation13 + $0x8] sm:$0xff] %vm78, %v2065
    %v2068 = vld [vmem:[#allocation2] sm:$0xff]
    %v2069 = vld [vmem:[#allocation2 + $0x8] sm:$0xff]
    %2070 = vst.msk [vmem:[#allocation14] sm:$0xff] %vm78, %v2068
    %2071 = vst.msk [vmem:[#allocation14 + $0x8] sm:$0xff] %vm78, %v2069
    // Predicated region
    $region34: #{tpu_custom_call.1} parent=1 // pred_check
      _
    $region35: #{tpu_custom_call.1} parent=1 // pred_check_branch
      %2073 = sbr.rel (0) target = $region37
    $region36: #{tpu_custom_call.1} parent=1 // pred_region
      %s2075 = ssub.s32 256, 256
      %2076 = vsyncadd [#allocation7], %s2075
      %s2077 = sshll.u32 [#allocation13], 4
      %s2078 = int_to_ptr.vmem [resolvable:$true] %s2077
      %2083 = dma.vmem_to_hbm [thread:$0]  %s2078, 256, %s4, [#allocation7], 128, 128, 8
    $region37: #{tpu_custom_call.1} parent=1 // pred_fallthru
      _
    // Predicated region
    $region38: #{tpu_custom_call.1} parent=1 // pred_check
      _
    $region39: #{tpu_custom_call.1} parent=1 // pred_check_branch
      %2085 = sbr.rel (0) target = $region41
    $region40: #{tpu_custom_call.1} parent=1 // pred_region
      %s2087 = ssub.s32 256, 256
      %2088 = vsyncadd [#allocation15], %s2087
      %s2089 = sshll.u32 [#allocation14], 4
      %s2090 = int_to_ptr.vmem [resolvable:$true] %s2089
      %2095 = dma.vmem_to_hbm [thread:$0]  %s2090, 256, %s5, [#allocation15], 128, 128, 8
    $region41: #{tpu_custom_call.1} parent=1 // pred_fallthru
      _
    // Predicated region
    $region42: #{tpu_custom_call.1} parent=1 // pred_check
      _
    $region43: #{tpu_custom_call.1} parent=1 // pred_check_branch
      %2097 = sbr.rel (0) target = $region45
    $region44: #{tpu_custom_call.1} parent=1 // pred_region
      %2098 = dma.done [#allocation7], 256
    $region45: #{tpu_custom_call.1} parent=1 // pred_fallthru
      _
    // Predicated region
    $region46: #{tpu_custom_call.1} parent=1 // pred_check
      _
    $region47: #{tpu_custom_call.1} parent=1 // pred_check_branch
      %2100 = sbr.rel (0) target = $region49
    $region48: #{tpu_custom_call.1} parent=1 // pred_region
      %2101 = dma.done [#allocation15], 256
    $region49: #{tpu_custom_call.1} parent=1 // pred_fallthru
      _
    %2102 = vsyncpa [#allocation6], 1
    %2103 = vsyncpa [#allocation9], 1
    %2104 = vsyncpa [#allocation12], 1
    %2105 = vsyncpa [#allocation7], 1
    %2106 = vsyncpa [#allocation15], 1

</llo_original>
